<compile_context>
chip_gen: v5e
topology: v5e:2x2
jax: 0.10.0
libtpu: 0.0.40
codegen_flags: <defaults>
</compile_context>

<pallas_src>
import functools
import jax
import jax.numpy as jnp
from jax.experimental import pallas as pl
from jax.experimental.pallas import tpu as pltpu

# ---- small BERT config (synthetic, consistent with the module's forward) ----
B, S, H = 2, 8, 32           # batch, seq len, hidden size
NH, DH = 4, 8                # heads, head dim (NH * DH == H)
FF = 64                      # intermediate size
VOCAB = 100
MAX_POS = 16
TYPE_VOCAB = 2
N_LAYERS = 2
LN_EPS = 1e-12
BS = S * B                   # folded token count (seq-major rows: row = s*B + b)

VEC_ROWS = 16                # rows per layer in the fused parameter slab
VEC_W = 4 * H                # 128 lanes (>= FF)
DATA_ROWS = BS + 8           # attention bias rows + label rows (padded)
OUT_ROWS, OUT_LANES = 8, 128 # lane-dense packed output (logits rows 0..B-1, loss row B)


# ------------------------------ in-kernel helpers ------------------------------
def _layernorm(x, gamma, beta):
    mu = jnp.mean(x, axis=-1, keepdims=True)
    var = jnp.mean((x - mu) ** 2, axis=-1, keepdims=True)
    return (x - mu) * jax.lax.rsqrt(var + LN_EPS) * gamma + beta


def _gelu(x):
    # TODO(synk): HF BERT uses exact erf-GELU; tanh approximation used here (keeps
    # transcendentals to tanh/exp which lower cleanly on the EUP).
    c = 0.7978845608028654  # sqrt(2/pi)
    return 0.5 * x * (1.0 + jnp.tanh(c * (x + 0.044715 * x * x * x)))


# ------------------------------ fused single-shot kernel ------------------------------
def biobert_kernel(emb_ref, data_ref, hm_ref, vec_ref, wqkvo_ref, w1_ref, w2_ref, out_ref):
    # ---- hoisted constants (loaded / broadcast exactly once) ----
    hm = hm_ref[...]                                   # [NH, 1, H] per-head 0/1 lane masks
    hm_scaled = hm * (1.0 / (DH ** 0.5))               # fold 1/sqrt(DH) into the q mask
    bias3 = data_ref[0:BS, :][None, :, :]              # [1, BS, BS] block-diag + padding bias

    c = vec_ref[0]                                     # [16, 128] layer-0 slab also carries consts
    # embedding LayerNorm (embedding dropout p=0.1 is identity: eval-mode forward)
    x = _layernorm(emb_ref[...], c[8:9, 0:H], c[9:10, 0:H])   # [BS, H]

    # ---- statically unrolled encoder layers, all weights resident in VMEM ----
    for l in range(N_LAYERS):
        W = wqkvo_ref[l]                               # [H, 4H]  (Wq | Wk | Wv | Wo columns)
        vec = vec_ref[l]                               # [16, 128] fused bias/LN slab

        # fused QKV(+O columns, unused product discarded) projection: one MXU pass
        proj = jnp.dot(x, W, preferred_element_type=jnp.float32) + vec[0:1, :]   # [BS, 4H]
        q = proj[:, 0 * H:1 * H]
        k = proj[:, 1 * H:2 * H]
        v = proj[:, 2 * H:3 * H]

        # multi-head attention: mask (and scale) q only; v masked for head reassembly
        qh = q[None, :, :] * hm_scaled                 # [NH, BS, H]
        kh = jnp.broadcast_to(k[None, :, :], (NH, BS, H))   # unmasked (exact, q is masked)
        vh = v[None, :, :] * hm                        # [NH, BS, H]

        scores = jnp.einsum('nqh,nkh->nqk', qh, kh,
                            preferred_element_type=jnp.float32)          # [NH, BS, BS]
        scores = scores + bias3
        scores = scores - jnp.max(scores, axis=-1, keepdims=True)
        p = jnp.exp(scores)
        p = p * pl.reciprocal(jnp.sum(p, axis=-1, keepdims=True), approx=True)
        # heads occupy disjoint lanes of vh -> summing over the head axis reassembles
        # the concatenated per-head context.
        ctx = jnp.sum(jnp.einsum('nqk,nkh->nqh', p, vh,
                                 preferred_element_type=jnp.float32), axis=0)   # [BS, H]

        attn = jnp.dot(ctx, W[:, 3 * H:], preferred_element_type=jnp.float32) + vec[0:1, 3 * H:]
        h1 = _layernorm(attn + x, vec[1:2, 0:H], vec[2:3, 0:H])

        ff = _gelu(jnp.dot(h1, w1_ref[l], preferred_element_type=jnp.float32) + vec[6:7, 0:FF])
        ff = jnp.dot(ff, w2_ref[l], preferred_element_type=jnp.float32) + vec[5:6, 0:H]
        x = _layernorm(ff + h1, vec[3:4, 0:H], vec[4:5, 0:H])

    # ---- CLS head (Linear(H,1)) + BCEWithLogitsLoss, lane-dense packed output ----
    # TODO(synk): classifier dropout (p=0.3) is identity (eval-mode forward).
    cls = x[0:B, :]                                    # seq-major fold: CLS tokens are rows 0..B-1
    z = jnp.sum(cls * c[10:11, 0:H], axis=-1, keepdims=True) + c[11:12, 0:1]    # [B, 1]
    y = data_ref[BS:BS + B, 0:1]                       # labels packed into the data slab
    # BCEWithLogitsLoss (mean reduction), numerically stable form:
    per = jnp.maximum(z, 0.0) - z * y + jnp.log(1.0 + jnp.exp(-jnp.abs(z)))
    loss = jnp.mean(per, axis=0, keepdims=True)        # [1, 1]

    out_ref[...] = jnp.zeros((OUT_ROWS, OUT_LANES), jnp.float32)
    out_ref[0:B, :] = jnp.broadcast_to(z, (B, OUT_LANES))        # logits, lane-dense rows
    out_ref[B:B + 1, :] = jnp.broadcast_to(loss, (1, OUT_LANES)) # loss, lane-dense row


# ------------------------------ wrapper ------------------------------
def pallas_biobert_core(emb_sb, data_slab, params):
    c2 = lambda i: (0, 0)
    c3 = lambda i: (0, 0, 0)
    out = pl.pallas_call(
        biobert_kernel,
        out_shape=jax.ShapeDtypeStruct((OUT_ROWS, OUT_LANES), jnp.float32),
        grid=(1,),                                     # single step: everything resident
        in_specs=[
            pl.BlockSpec((BS, H), c2),                 # embeddings (pre-LN), seq-major
            pl.BlockSpec((DATA_ROWS, BS), c2),         # attention bias rows + label rows
            pl.BlockSpec((NH, 1, H), c3),              # per-head lane masks
            pl.BlockSpec((N_LAYERS, VEC_ROWS, VEC_W), c3),   # fused bias/LN/const slab
            pl.BlockSpec((N_LAYERS, H, 4 * H), c3),    # W_qkvo slabs (all layers)
            pl.BlockSpec((N_LAYERS, H, FF), c3),       # W_ffn1 slabs
            pl.BlockSpec((N_LAYERS, FF, H), c3),       # W_ffn2 slabs
        ],
        out_specs=pl.BlockSpec((OUT_ROWS, OUT_LANES), c2),
        compiler_params=pltpu.CompilerParams(dimension_semantics=("arbitrary",)),
    )(emb_sb, data_slab, params["head_masks"], params["vec_slab"],
      params["w_qkvo"], params["w_ffn1"], params["w_ffn2"])
    logits = out[0:B, 0:1]                             # [B, 1]
    loss = out[B, 0]                                   # scalar
    return logits, loss


# ------------------------------ params & forward ------------------------------
def init_params(key):
    kit = iter(jax.random.split(key, 64))

    def nrm(shape):
        return jax.random.normal(next(kit), shape, jnp.float32) * 0.02

    def row(v):
        v = jnp.asarray(v, jnp.float32).reshape(-1)
        return jnp.pad(v, (0, VEC_W - v.shape[0]))

    word_emb = nrm((VOCAB, H))
    pos_emb = nrm((MAX_POS, H))
    type_emb = nrm((TYPE_VOCAB, H))

    head_w = nrm((H,))          # nn.Linear(H, 1) weight (row form)
    head_b = nrm((1,))          # nn.Linear(H, 1) bias

    # per-head 0/1 lane masks [NH, 1, H]
    head_masks = (jnp.arange(H)[None, :] // DH
                  == jnp.arange(NH)[:, None]).astype(jnp.float32)[:, None, :]

    vec_slab, w_qkvo, w_ffn1, w_ffn2 = [], [], [], []
    for l in range(N_LAYERS):
        w_qkvo.append(jnp.concatenate([nrm((H, H)) for _ in range(4)], axis=1))  # Wq|Wk|Wv|Wo
        b_qkvo = jnp.concatenate([nrm((H,)) for _ in range(4)])                  # bq|bk|bv|bo
        w_ffn1.append(nrm((H, FF)))
        b_ffn1 = nrm((FF,))
        w_ffn2.append(nrm((FF, H)))
        b_ffn2 = nrm((H,))
        rows = [
            row(b_qkvo),                     # 0: qkv+o biases (4H lanes)
            row(jnp.ones((H,))),             # 1: ln1 gamma
            row(jnp.zeros((H,))),            # 2: ln1 beta
            row(jnp.ones((H,))),             # 3: ln2 gamma
            row(jnp.zeros((H,))),            # 4: ln2 beta
            row(b_ffn2),                     # 5: FFN output bias
            row(b_ffn1),                     # 6: FFN intermediate bias
            row(jnp.zeros((1,))),            # 7: pad
        ]
        if l == 0:                           # layer-0 slab also carries the constants
            rows += [
                row(jnp.ones((H,))),         # 8: embedding LN gamma
                row(jnp.zeros((H,))),        # 9: embedding LN beta
                row(head_w),                 # 10: classifier weight row
                row(head_b),                 # 11: classifier bias (lane 0)
            ]
        rows += [row(jnp.zeros((1,)))] * (VEC_ROWS - len(rows))
        vec_slab.append(jnp.stack(rows, axis=0))       # [16, 128]

    return {
        "word_emb": word_emb, "pos_emb": pos_emb, "type_emb": type_emb,
        "head_masks": head_masks,
        "vec_slab": jnp.stack(vec_slab),               # [N_LAYERS, 16, 128]
        "w_qkvo": jnp.stack(w_qkvo),                   # [N_LAYERS, H, 4H]
        "w_ffn1": jnp.stack(w_ffn1),                   # [N_LAYERS, H, FF]
        "w_ffn2": jnp.stack(w_ffn2),                   # [N_LAYERS, FF, H]
    }


def biobert_ner_forward(params, ids, mask, seg_ids, labels):
    # Embedding gathers are glue (XLA); LayerNorm + encoder + head + loss run in Pallas.
    positions = jnp.arange(S)
    emb = (params["word_emb"][ids]
           + params["pos_emb"][positions][None, :, :]
           + params["type_emb"][seg_ids])                       # [B, S, H]
    # fold tokens seq-major: row r = s*B + b  (CLS tokens end up in rows 0..B-1)
    emb_sb = jnp.transpose(emb, (1, 0, 2)).reshape(BS, H)

    # additive attention bias [BS, BS]: -1e4 for cross-batch pairs and padded keys
    rows = jnp.arange(BS)
    b_of = rows % B
    s_of = rows // B
    key_valid = mask.astype(jnp.float32)[b_of, s_of]            # [BS]
    same_batch = (b_of[:, None] == b_of[None, :]).astype(jnp.float32)
    attn_bias = (1.0 - same_batch * key_valid[None, :]) * -10000.0

    # fused data slab: rows 0..BS-1 = attention bias, rows BS..BS+B-1 (col 0) = labels
    lab_rows = jnp.zeros((DATA_ROWS - BS, BS), jnp.float32)
    lab_rows = lab_rows.at[0:B, 0].set(labels.astype(jnp.float32))
    data_slab = jnp.concatenate([attn_bias, lab_rows], axis=0)  # [BS+8, BS]

    logits, loss = pallas_biobert_core(emb_sb, data_slab, params)
    return logits, loss


if __name__ == "__main__":
    key = jax.random.PRNGKey(0)
    k_par, k_ids, k_seg, k_lab = jax.random.split(key, 4)

    params = init_params(k_par)
    ids = jax.random.randint(k_ids, (B, S), 0, VOCAB, dtype=jnp.int32)
    seg_ids = jax.random.randint(k_seg, (B, S), 0, TYPE_VOCAB, dtype=jnp.int32)
    labels = jax.random.bernoulli(k_lab, 0.5, (B,)).astype(jnp.float32)
    mask = jnp.ones((B, S), jnp.int32).at[1, S - 2:].set(0)     # some padding

    fwd = jax.jit(functools.partial(biobert_ner_forward, params))
    logits, loss = fwd(ids, mask, seg_ids, labels)
    jax.block_until_ready((logits, loss))

    assert logits.shape == (B, 1) and loss.shape == ()
    assert bool(jnp.all(jnp.isfinite(logits))) and bool(jnp.isfinite(loss))
    print("KERNEL_OK")
</pallas_src>

<mosaic_0001>
module attributes {stable_mosaic.version = 11 : i64} {
  func.func @biobert_kernel(%arg0: i32, %arg1: memref<16x32xf32, #tpu.memory_space<vmem>>, %arg2: memref<24x16xf32, #tpu.memory_space<vmem>>, %arg3: memref<4x1x32xf32, #tpu.memory_space<vmem>>, %arg4: memref<2x16x128xf32, #tpu.memory_space<vmem>>, %arg5: memref<2x32x128xf32, #tpu.memory_space<vmem>>, %arg6: memref<2x32x64xf32, #tpu.memory_space<vmem>>, %arg7: memref<2x64x32xf32, #tpu.memory_space<vmem>>, %arg8: memref<8x128xf32, #tpu.memory_space<vmem>>) attributes {dimension_semantics = [#tpu.dimension_semantics<arbitrary>], iteration_bounds = array<i64: 1>, scalar_prefetch = 0 : i64, scratch_operands = 0 : i64, tpu.core_type = #tpu.core_type<tc>, window_params = [{pipeline_mode = #tpu.pipeline_mode<synchronous>, transform_indices = @transform_0, window_bounds = array<i64: 16, 32>}, {pipeline_mode = #tpu.pipeline_mode<synchronous>, transform_indices = @transform_1, window_bounds = array<i64: 24, 16>}, {pipeline_mode = #tpu.pipeline_mode<synchronous>, transform_indices = @transform_2, window_bounds = array<i64: 4, 1, 32>}, {pipeline_mode = #tpu.pipeline_mode<synchronous>, transform_indices = @transform_3, window_bounds = array<i64: 2, 16, 128>}, {pipeline_mode = #tpu.pipeline_mode<synchronous>, transform_indices = @transform_4, window_bounds = array<i64: 2, 32, 128>}, {pipeline_mode = #tpu.pipeline_mode<synchronous>, transform_indices = @transform_5, window_bounds = array<i64: 2, 32, 64>}, {pipeline_mode = #tpu.pipeline_mode<synchronous>, transform_indices = @transform_6, window_bounds = array<i64: 2, 64, 32>}, {pipeline_mode = #tpu.pipeline_mode<synchronous>, transform_indices = @transform_7, window_bounds = array<i64: 8, 128>}]} {
    %c0 = arith.constant 0 : index
    %c0_0 = arith.constant 0 : index
    %c0_1 = arith.constant 0 : index
    %0 = vector.load %arg3[%c0, %c0_0, %c0_1] : memref<4x1x32xf32, #tpu.memory_space<vmem>>, vector<4x1x32xf32>
    %cst = arith.constant 0.353553385 : f32
    %1 = vector.broadcast %cst : f32 to vector<4x1x32xf32>
    %2 = arith.mulf %0, %1 : vector<4x1x32xf32>
    %c0_2 = arith.constant 0 : index
    %c0_3 = arith.constant 0 : index
    %3 = vector.load %arg2[%c0_2, %c0_3] : memref<24x16xf32, #tpu.memory_space<vmem>>, vector<16x16xf32>
    %4 = vector.shape_cast %3 : vector<16x16xf32> to vector<1x16x16xf32>
    %c0_4 = arith.constant 0 : index
    %c0_5 = arith.constant 0 : index
    %c0_6 = arith.constant 0 : index
    %5 = vector.load %arg4[%c0_4, %c0_5, %c0_6] : memref<2x16x128xf32, #tpu.memory_space<vmem>>, vector<1x16x128xf32>
    %6 = vector.shape_cast %5 : vector<1x16x128xf32> to vector<16x128xf32>
    %c0_7 = arith.constant 0 : index
    %c0_8 = arith.constant 0 : index
    %7 = vector.load %arg1[%c0_7, %c0_8] : memref<16x32xf32, #tpu.memory_space<vmem>>, vector<16x32xf32>
    %8 = vector.extract_strided_slice %6 {offsets = [8, 0], sizes = [1, 32], strides = [1, 1]} : vector<16x128xf32> to vector<1x32xf32>
    %9 = vector.extract_strided_slice %6 {offsets = [9, 0], sizes = [1, 32], strides = [1, 1]} : vector<16x128xf32> to vector<1x32xf32>
    %cst_9 = arith.constant dense<0.000000e+00> : vector<16xf32>
    %10 = vector.multi_reduction <add>, %7, %cst_9 [1] : vector<16x32xf32> to vector<16xf32>
    %11 = vector.shape_cast %10 : vector<16xf32> to vector<16x1xf32>
    %cst_10 = arith.constant 3.200000e+01 : f32
    %12 = vector.broadcast %cst_10 : f32 to vector<16x1xf32>
    %13 = arith.divf %11, %12 : vector<16x1xf32>
    %14 = vector.broadcast %13 : vector<16x1xf32> to vector<16x32xf32>
    %15 = arith.subf %7, %14 : vector<16x32xf32>
    %16 = arith.mulf %15, %15 : vector<16x32xf32>
    %cst_11 = arith.constant dense<0.000000e+00> : vector<16xf32>
    %17 = vector.multi_reduction <add>, %16, %cst_11 [1] : vector<16x32xf32> to vector<16xf32>
    %18 = vector.shape_cast %17 : vector<16xf32> to vector<16x1xf32>
    %cst_12 = arith.constant 3.200000e+01 : f32
    %19 = vector.broadcast %cst_12 : f32 to vector<16x1xf32>
    %20 = arith.divf %18, %19 : vector<16x1xf32>
    %21 = vector.broadcast %13 : vector<16x1xf32> to vector<16x32xf32>
    %22 = arith.subf %7, %21 : vector<16x32xf32>
    %cst_13 = arith.constant 9.99999996E-13 : f32
    %23 = vector.broadcast %cst_13 : f32 to vector<16x1xf32>
    %24 = arith.addf %20, %23 : vector<16x1xf32>
    %25 = math.rsqrt %24 : vector<16x1xf32>
    %26 = vector.broadcast %25 : vector<16x1xf32> to vector<16x32xf32>
    %27 = arith.mulf %22, %26 : vector<16x32xf32>
    %28 = vector.broadcast %8 : vector<1x32xf32> to vector<16x32xf32>
    %29 = arith.mulf %27, %28 : vector<16x32xf32>
    %30 = vector.broadcast %9 : vector<1x32xf32> to vector<16x32xf32>
    %31 = arith.addf %29, %30 : vector<16x32xf32>
    %c0_14 = arith.constant 0 : index
    %c0_15 = arith.constant 0 : index
    %c0_16 = arith.constant 0 : index
    %32 = vector.load %arg5[%c0_14, %c0_15, %c0_16] : memref<2x32x128xf32, #tpu.memory_space<vmem>>, vector<1x32x128xf32>
    %33 = vector.shape_cast %32 : vector<1x32x128xf32> to vector<32x128xf32>
    %c0_17 = arith.constant 0 : index
    %c0_18 = arith.constant 0 : index
    %c0_19 = arith.constant 0 : index
    %34 = vector.load %arg4[%c0_17, %c0_18, %c0_19] : memref<2x16x128xf32, #tpu.memory_space<vmem>>, vector<1x16x128xf32>
    %35 = vector.shape_cast %34 : vector<1x16x128xf32> to vector<16x128xf32>
    %cst_20 = arith.constant dense<0.000000e+00> : vector<16x128xf32>
    %36 = tpu.matmul %31, %33, %cst_20 {dimension_numbers = #tpu.dot_dimension_numbers<[1], [0], [0], [1], [0, 0, 1, 1], [], []>} : vector<16x32xf32>, vector<32x128xf32>, vector<16x128xf32> -> vector<16x128xf32>
    %37 = vector.extract_strided_slice %35 {offsets = [0, 0], sizes = [1, 128], strides = [1, 1]} : vector<16x128xf32> to vector<1x128xf32>
    %38 = vector.broadcast %37 : vector<1x128xf32> to vector<16x128xf32>
    %39 = arith.addf %36, %38 : vector<16x128xf32>
    %40 = vector.extract_strided_slice %39 {offsets = [0, 0], sizes = [16, 32], strides = [1, 1]} : vector<16x128xf32> to vector<16x32xf32>
    %41 = vector.extract_strided_slice %39 {offsets = [0, 32], sizes = [16, 32], strides = [1, 1]} : vector<16x128xf32> to vector<16x32xf32>
    %42 = vector.extract_strided_slice %39 {offsets = [0, 64], sizes = [16, 32], strides = [1, 1]} : vector<16x128xf32> to vector<16x32xf32>
    %43 = vector.shape_cast %40 : vector<16x32xf32> to vector<1x16x32xf32>
    %44 = vector.broadcast %43 : vector<1x16x32xf32> to vector<4x16x32xf32>
    %45 = vector.broadcast %2 : vector<4x1x32xf32> to vector<4x16x32xf32>
    %46 = arith.mulf %44, %45 : vector<4x16x32xf32>
    %47 = vector.shape_cast %41 : vector<16x32xf32> to vector<1x16x32xf32>
    %48 = vector.shape_cast %47 : vector<1x16x32xf32> to vector<1x16x32xf32>
    %49 = vector.broadcast %48 : vector<1x16x32xf32> to vector<4x16x32xf32>
    %50 = vector.shape_cast %42 : vector<16x32xf32> to vector<1x16x32xf32>
    %51 = vector.broadcast %50 : vector<1x16x32xf32> to vector<4x16x32xf32>
    %52 = vector.broadcast %0 : vector<4x1x32xf32> to vector<4x16x32xf32>
    %53 = arith.mulf %51, %52 : vector<4x16x32xf32>
    "tpu.trace_start"() <{level = 10 : i32, message = "nqh,nkh->nqk"}> : () -> ()
    %cst_21 = arith.constant dense<0.000000e+00> : vector<4x16x16xf32>
    %54 = tpu.matmul %46, %49, %cst_21 {dimension_numbers = #tpu.dot_dimension_numbers<[2], [2], [1], [1], [0, 0, 0, 1, 1, 1], [0], [0]>} : vector<4x16x32xf32>, vector<4x16x32xf32>, vector<4x16x16xf32> -> vector<4x16x16xf32>
    "tpu.trace_stop"() : () -> ()
    %55 = vector.broadcast %4 : vector<1x16x16xf32> to vector<4x16x16xf32>
    %56 = arith.addf %54, %55 : vector<4x16x16xf32>
    %cst_22 = arith.constant dense<0xFF800000> : vector<4x16xf32>
    %57 = vector.multi_reduction <maximumf>, %56, %cst_22 [2] : vector<4x16x16xf32> to vector<4x16xf32>
    %58 = vector.shape_cast %57 : vector<4x16xf32> to vector<4x16x1xf32>
    %59 = vector.broadcast %58 : vector<4x16x1xf32> to vector<4x16x16xf32>
    %60 = arith.subf %56, %59 : vector<4x16x16xf32>
    %61 = math.exp %60 : vector<4x16x16xf32>
    %cst_23 = arith.constant dense<0.000000e+00> : vector<4x16xf32>
    %62 = vector.multi_reduction <add>, %61, %cst_23 [2] : vector<4x16x16xf32> to vector<4x16xf32>
    %63 = vector.shape_cast %62 : vector<4x16xf32> to vector<4x16x1xf32>
    %64 = tpu.reciprocal %63 {approx = true} : vector<4x16x1xf32> -> vector<4x16x1xf32>
    %65 = vector.broadcast %64 : vector<4x16x1xf32> to vector<4x16x16xf32>
    %66 = arith.mulf %61, %65 : vector<4x16x16xf32>
    "tpu.trace_start"() <{level = 10 : i32, message = "nqk,nkh->nqh"}> : () -> ()
    %cst_24 = arith.constant dense<0.000000e+00> : vector<4x16x32xf32>
    %67 = tpu.matmul %66, %53, %cst_24 {dimension_numbers = #tpu.dot_dimension_numbers<[2], [1], [1], [2], [0, 0, 0, 1, 1, 2], [0], [0]>} : vector<4x16x16xf32>, vector<4x16x32xf32>, vector<4x16x32xf32> -> vector<4x16x32xf32>
    "tpu.trace_stop"() : () -> ()
    %cst_25 = arith.constant dense<0.000000e+00> : vector<16x32xf32>
    %68 = vector.multi_reduction <add>, %67, %cst_25 [0] : vector<4x16x32xf32> to vector<16x32xf32>
    %69 = vector.extract_strided_slice %33 {offsets = [0, 96], sizes = [32, 32], strides = [1, 1]} : vector<32x128xf32> to vector<32x32xf32>
    %cst_26 = arith.constant dense<0.000000e+00> : vector<16x32xf32>
    %70 = tpu.matmul %68, %69, %cst_26 {dimension_numbers = #tpu.dot_dimension_numbers<[1], [0], [0], [1], [0, 0, 1, 1], [], []>} : vector<16x32xf32>, vector<32x32xf32>, vector<16x32xf32> -> vector<16x32xf32>
    %71 = vector.extract_strided_slice %35 {offsets = [0, 96], sizes = [1, 32], strides = [1, 1]} : vector<16x128xf32> to vector<1x32xf32>
    %72 = vector.broadcast %71 : vector<1x32xf32> to vector<16x32xf32>
    %73 = arith.addf %70, %72 : vector<16x32xf32>
    %74 = arith.addf %73, %31 : vector<16x32xf32>
    %75 = vector.extract_strided_slice %35 {offsets = [1, 0], sizes = [1, 32], strides = [1, 1]} : vector<16x128xf32> to vector<1x32xf32>
    %76 = vector.extract_strided_slice %35 {offsets = [2, 0], sizes = [1, 32], strides = [1, 1]} : vector<16x128xf32> to vector<1x32xf32>
    %cst_27 = arith.constant dense<0.000000e+00> : vector<16xf32>
    %77 = vector.multi_reduction <add>, %74, %cst_27 [1] : vector<16x32xf32> to vector<16xf32>
    %78 = vector.shape_cast %77 : vector<16xf32> to vector<16x1xf32>
    %cst_28 = arith.constant 3.200000e+01 : f32
    %79 = vector.broadcast %cst_28 : f32 to vector<16x1xf32>
    %80 = arith.divf %78, %79 : vector<16x1xf32>
    %81 = vector.broadcast %80 : vector<16x1xf32> to vector<16x32xf32>
    %82 = arith.subf %74, %81 : vector<16x32xf32>
    %83 = arith.mulf %82, %82 : vector<16x32xf32>
    %cst_29 = arith.constant dense<0.000000e+00> : vector<16xf32>
    %84 = vector.multi_reduction <add>, %83, %cst_29 [1] : vector<16x32xf32> to vector<16xf32>
    %85 = vector.shape_cast %84 : vector<16xf32> to vector<16x1xf32>
    %cst_30 = arith.constant 3.200000e+01 : f32
    %86 = vector.broadcast %cst_30 : f32 to vector<16x1xf32>
    %87 = arith.divf %85, %86 : vector<16x1xf32>
    %88 = vector.broadcast %80 : vector<16x1xf32> to vector<16x32xf32>
    %89 = arith.subf %74, %88 : vector<16x32xf32>
    %cst_31 = arith.constant 9.99999996E-13 : f32
    %90 = vector.broadcast %cst_31 : f32 to vector<16x1xf32>
    %91 = arith.addf %87, %90 : vector<16x1xf32>
    %92 = math.rsqrt %91 : vector<16x1xf32>
    %93 = vector.broadcast %92 : vector<16x1xf32> to vector<16x32xf32>
    %94 = arith.mulf %89, %93 : vector<16x32xf32>
    %95 = vector.broadcast %75 : vector<1x32xf32> to vector<16x32xf32>
    %96 = arith.mulf %94, %95 : vector<16x32xf32>
    %97 = vector.broadcast %76 : vector<1x32xf32> to vector<16x32xf32>
    %98 = arith.addf %96, %97 : vector<16x32xf32>
    %c0_32 = arith.constant 0 : index
    %c0_33 = arith.constant 0 : index
    %c0_34 = arith.constant 0 : index
    %99 = vector.load %arg6[%c0_32, %c0_33, %c0_34] : memref<2x32x64xf32, #tpu.memory_space<vmem>>, vector<1x32x64xf32>
    %100 = vector.shape_cast %99 : vector<1x32x64xf32> to vector<32x64xf32>
    %cst_35 = arith.constant dense<0.000000e+00> : vector<16x64xf32>
    %101 = tpu.matmul %98, %100, %cst_35 {dimension_numbers = #tpu.dot_dimension_numbers<[1], [0], [0], [1], [0, 0, 1, 1], [], []>} : vector<16x32xf32>, vector<32x64xf32>, vector<16x64xf32> -> vector<16x64xf32>
    %102 = vector.extract_strided_slice %35 {offsets = [6, 0], sizes = [1, 64], strides = [1, 1]} : vector<16x128xf32> to vector<1x64xf32>
    %103 = vector.broadcast %102 : vector<1x64xf32> to vector<16x64xf32>
    %104 = arith.addf %101, %103 : vector<16x64xf32>
    %cst_36 = arith.constant 5.000000e-01 : f32
    %105 = vector.broadcast %cst_36 : f32 to vector<16x64xf32>
    %106 = arith.mulf %105, %104 : vector<16x64xf32>
    %cst_37 = arith.constant 4.471500e-02 : f32
    %107 = vector.broadcast %cst_37 : f32 to vector<16x64xf32>
    %108 = arith.mulf %107, %104 : vector<16x64xf32>
    %109 = arith.mulf %108, %104 : vector<16x64xf32>
    %110 = arith.mulf %109, %104 : vector<16x64xf32>
    %111 = arith.addf %104, %110 : vector<16x64xf32>
    %cst_38 = arith.constant 0.797884583 : f32
    %112 = vector.broadcast %cst_38 : f32 to vector<16x64xf32>
    %113 = arith.mulf %112, %111 : vector<16x64xf32>
    %114 = math.tanh %113 : vector<16x64xf32>
    %cst_39 = arith.constant 1.000000e+00 : f32
    %115 = vector.broadcast %cst_39 : f32 to vector<16x64xf32>
    %116 = arith.addf %115, %114 : vector<16x64xf32>
    %117 = arith.mulf %106, %116 : vector<16x64xf32>
    %c0_40 = arith.constant 0 : index
    %c0_41 = arith.constant 0 : index
    %c0_42 = arith.constant 0 : index
    %118 = vector.load %arg7[%c0_40, %c0_41, %c0_42] : memref<2x64x32xf32, #tpu.memory_space<vmem>>, vector<1x64x32xf32>
    %119 = vector.shape_cast %118 : vector<1x64x32xf32> to vector<64x32xf32>
    %cst_43 = arith.constant dense<0.000000e+00> : vector<16x32xf32>
    %120 = tpu.matmul %117, %119, %cst_43 {dimension_numbers = #tpu.dot_dimension_numbers<[1], [0], [0], [1], [0, 0, 1, 1], [], []>} : vector<16x64xf32>, vector<64x32xf32>, vector<16x32xf32> -> vector<16x32xf32>
    %121 = vector.extract_strided_slice %35 {offsets = [5, 0], sizes = [1, 32], strides = [1, 1]} : vector<16x128xf32> to vector<1x32xf32>
    %122 = vector.broadcast %121 : vector<1x32xf32> to vector<16x32xf32>
    %123 = arith.addf %120, %122 : vector<16x32xf32>
    %124 = arith.addf %123, %98 : vector<16x32xf32>
    %125 = vector.extract_strided_slice %35 {offsets = [3, 0], sizes = [1, 32], strides = [1, 1]} : vector<16x128xf32> to vector<1x32xf32>
    %126 = vector.extract_strided_slice %35 {offsets = [4, 0], sizes = [1, 32], strides = [1, 1]} : vector<16x128xf32> to vector<1x32xf32>
    %cst_44 = arith.constant dense<0.000000e+00> : vector<16xf32>
    %127 = vector.multi_reduction <add>, %124, %cst_44 [1] : vector<16x32xf32> to vector<16xf32>
    %128 = vector.shape_cast %127 : vector<16xf32> to vector<16x1xf32>
    %cst_45 = arith.constant 3.200000e+01 : f32
    %129 = vector.broadcast %cst_45 : f32 to vector<16x1xf32>
    %130 = arith.divf %128, %129 : vector<16x1xf32>
    %131 = vector.broadcast %130 : vector<16x1xf32> to vector<16x32xf32>
    %132 = arith.subf %124, %131 : vector<16x32xf32>
    %133 = arith.mulf %132, %132 : vector<16x32xf32>
    %cst_46 = arith.constant dense<0.000000e+00> : vector<16xf32>
    %134 = vector.multi_reduction <add>, %133, %cst_46 [1] : vector<16x32xf32> to vector<16xf32>
    %135 = vector.shape_cast %134 : vector<16xf32> to vector<16x1xf32>
    %cst_47 = arith.constant 3.200000e+01 : f32
    %136 = vector.broadcast %cst_47 : f32 to vector<16x1xf32>
    %137 = arith.divf %135, %136 : vector<16x1xf32>
    %138 = vector.broadcast %130 : vector<16x1xf32> to vector<16x32xf32>
    %139 = arith.subf %124, %138 : vector<16x32xf32>
    %cst_48 = arith.constant 9.99999996E-13 : f32
    %140 = vector.broadcast %cst_48 : f32 to vector<16x1xf32>
    %141 = arith.addf %137, %140 : vector<16x1xf32>
    %142 = math.rsqrt %141 : vector<16x1xf32>
    %143 = vector.broadcast %142 : vector<16x1xf32> to vector<16x32xf32>
    %144 = arith.mulf %139, %143 : vector<16x32xf32>
    %145 = vector.broadcast %125 : vector<1x32xf32> to vector<16x32xf32>
    %146 = arith.mulf %144, %145 : vector<16x32xf32>
    %147 = vector.broadcast %126 : vector<1x32xf32> to vector<16x32xf32>
    %148 = arith.addf %146, %147 : vector<16x32xf32>
    %c1 = arith.constant 1 : index
    %c0_49 = arith.constant 0 : index
    %c0_50 = arith.constant 0 : index
    %149 = vector.load %arg5[%c1, %c0_49, %c0_50] : memref<2x32x128xf32, #tpu.memory_space<vmem>>, vector<1x32x128xf32>
    %150 = vector.shape_cast %149 : vector<1x32x128xf32> to vector<32x128xf32>
    %c1_51 = arith.constant 1 : index
    %c0_52 = arith.constant 0 : index
    %c0_53 = arith.constant 0 : index
    %151 = vector.load %arg4[%c1_51, %c0_52, %c0_53] : memref<2x16x128xf32, #tpu.memory_space<vmem>>, vector<1x16x128xf32>
    %152 = vector.shape_cast %151 : vector<1x16x128xf32> to vector<16x128xf32>
    %cst_54 = arith.constant dense<0.000000e+00> : vector<16x128xf32>
    %153 = tpu.matmul %148, %150, %cst_54 {dimension_numbers = #tpu.dot_dimension_numbers<[1], [0], [0], [1], [0, 0, 1, 1], [], []>} : vector<16x32xf32>, vector<32x128xf32>, vector<16x128xf32> -> vector<16x128xf32>
    %154 = vector.extract_strided_slice %152 {offsets = [0, 0], sizes = [1, 128], strides = [1, 1]} : vector<16x128xf32> to vector<1x128xf32>
    %155 = vector.broadcast %154 : vector<1x128xf32> to vector<16x128xf32>
    %156 = arith.addf %153, %155 : vector<16x128xf32>
    %157 = vector.extract_strided_slice %156 {offsets = [0, 0], sizes = [16, 32], strides = [1, 1]} : vector<16x128xf32> to vector<16x32xf32>
    %158 = vector.extract_strided_slice %156 {offsets = [0, 32], sizes = [16, 32], strides = [1, 1]} : vector<16x128xf32> to vector<16x32xf32>
    %159 = vector.extract_strided_slice %156 {offsets = [0, 64], sizes = [16, 32], strides = [1, 1]} : vector<16x128xf32> to vector<16x32xf32>
    %160 = vector.shape_cast %157 : vector<16x32xf32> to vector<1x16x32xf32>
    %161 = vector.broadcast %160 : vector<1x16x32xf32> to vector<4x16x32xf32>
    %162 = vector.broadcast %2 : vector<4x1x32xf32> to vector<4x16x32xf32>
    %163 = arith.mulf %161, %162 : vector<4x16x32xf32>
    %164 = vector.shape_cast %158 : vector<16x32xf32> to vector<1x16x32xf32>
    %165 = vector.shape_cast %164 : vector<1x16x32xf32> to vector<1x16x32xf32>
    %166 = vector.broadcast %165 : vector<1x16x32xf32> to vector<4x16x32xf32>
    %167 = vector.shape_cast %159 : vector<16x32xf32> to vector<1x16x32xf32>
    %168 = vector.broadcast %167 : vector<1x16x32xf32> to vector<4x16x32xf32>
    %169 = vector.broadcast %0 : vector<4x1x32xf32> to vector<4x16x32xf32>
    %170 = arith.mulf %168, %169 : vector<4x16x32xf32>
    "tpu.trace_start"() <{level = 10 : i32, message = "nqh,nkh->nqk"}> : () -> ()
    %cst_55 = arith.constant dense<0.000000e+00> : vector<4x16x16xf32>
    %171 = tpu.matmul %163, %166, %cst_55 {dimension_numbers = #tpu.dot_dimension_numbers<[2], [2], [1], [1], [0, 0, 0, 1, 1, 1], [0], [0]>} : vector<4x16x32xf32>, vector<4x16x32xf32>, vector<4x16x16xf32> -> vector<4x16x16xf32>
    "tpu.trace_stop"() : () -> ()
    %172 = vector.broadcast %4 : vector<1x16x16xf32> to vector<4x16x16xf32>
    %173 = arith.addf %171, %172 : vector<4x16x16xf32>
    %cst_56 = arith.constant dense<0xFF800000> : vector<4x16xf32>
    %174 = vector.multi_reduction <maximumf>, %173, %cst_56 [2] : vector<4x16x16xf32> to vector<4x16xf32>
    %175 = vector.shape_cast %174 : vector<4x16xf32> to vector<4x16x1xf32>
    %176 = vector.broadcast %175 : vector<4x16x1xf32> to vector<4x16x16xf32>
    %177 = arith.subf %173, %176 : vector<4x16x16xf32>
    %178 = math.exp %177 : vector<4x16x16xf32>
    %cst_57 = arith.constant dense<0.000000e+00> : vector<4x16xf32>
    %179 = vector.multi_reduction <add>, %178, %cst_57 [2] : vector<4x16x16xf32> to vector<4x16xf32>
    %180 = vector.shape_cast %179 : vector<4x16xf32> to vector<4x16x1xf32>
    %181 = tpu.reciprocal %180 {approx = true} : vector<4x16x1xf32> -> vector<4x16x1xf32>
    %182 = vector.broadcast %181 : vector<4x16x1xf32> to vector<4x16x16xf32>
    %183 = arith.mulf %178, %182 : vector<4x16x16xf32>
    "tpu.trace_start"() <{level = 10 : i32, message = "nqk,nkh->nqh"}> : () -> ()
    %cst_58 = arith.constant dense<0.000000e+00> : vector<4x16x32xf32>
    %184 = tpu.matmul %183, %170, %cst_58 {dimension_numbers = #tpu.dot_dimension_numbers<[2], [1], [1], [2], [0, 0, 0, 1, 1, 2], [0], [0]>} : vector<4x16x16xf32>, vector<4x16x32xf32>, vector<4x16x32xf32> -> vector<4x16x32xf32>
    "tpu.trace_stop"() : () -> ()
    %cst_59 = arith.constant dense<0.000000e+00> : vector<16x32xf32>
    %185 = vector.multi_reduction <add>, %184, %cst_59 [0] : vector<4x16x32xf32> to vector<16x32xf32>
    %186 = vector.extract_strided_slice %150 {offsets = [0, 96], sizes = [32, 32], strides = [1, 1]} : vector<32x128xf32> to vector<32x32xf32>
    %cst_60 = arith.constant dense<0.000000e+00> : vector<16x32xf32>
    %187 = tpu.matmul %185, %186, %cst_60 {dimension_numbers = #tpu.dot_dimension_numbers<[1], [0], [0], [1], [0, 0, 1, 1], [], []>} : vector<16x32xf32>, vector<32x32xf32>, vector<16x32xf32> -> vector<16x32xf32>
    %188 = vector.extract_strided_slice %152 {offsets = [0, 96], sizes = [1, 32], strides = [1, 1]} : vector<16x128xf32> to vector<1x32xf32>
    %189 = vector.broadcast %188 : vector<1x32xf32> to vector<16x32xf32>
    %190 = arith.addf %187, %189 : vector<16x32xf32>
    %191 = arith.addf %190, %148 : vector<16x32xf32>
    %192 = vector.extract_strided_slice %152 {offsets = [1, 0], sizes = [1, 32], strides = [1, 1]} : vector<16x128xf32> to vector<1x32xf32>
    %193 = vector.extract_strided_slice %152 {offsets = [2, 0], sizes = [1, 32], strides = [1, 1]} : vector<16x128xf32> to vector<1x32xf32>
    %cst_61 = arith.constant dense<0.000000e+00> : vector<16xf32>
    %194 = vector.multi_reduction <add>, %191, %cst_61 [1] : vector<16x32xf32> to vector<16xf32>
    %195 = vector.shape_cast %194 : vector<16xf32> to vector<16x1xf32>
    %cst_62 = arith.constant 3.200000e+01 : f32
    %196 = vector.broadcast %cst_62 : f32 to vector<16x1xf32>
    %197 = arith.divf %195, %196 : vector<16x1xf32>
    %198 = vector.broadcast %197 : vector<16x1xf32> to vector<16x32xf32>
    %199 = arith.subf %191, %198 : vector<16x32xf32>
    %200 = arith.mulf %199, %199 : vector<16x32xf32>
    %cst_63 = arith.constant dense<0.000000e+00> : vector<16xf32>
    %201 = vector.multi_reduction <add>, %200, %cst_63 [1] : vector<16x32xf32> to vector<16xf32>
    %202 = vector.shape_cast %201 : vector<16xf32> to vector<16x1xf32>
    %cst_64 = arith.constant 3.200000e+01 : f32
    %203 = vector.broadcast %cst_64 : f32 to vector<16x1xf32>
    %204 = arith.divf %202, %203 : vector<16x1xf32>
    %205 = vector.broadcast %197 : vector<16x1xf32> to vector<16x32xf32>
    %206 = arith.subf %191, %205 : vector<16x32xf32>
    %cst_65 = arith.constant 9.99999996E-13 : f32
    %207 = vector.broadcast %cst_65 : f32 to vector<16x1xf32>
    %208 = arith.addf %204, %207 : vector<16x1xf32>
    %209 = math.rsqrt %208 : vector<16x1xf32>
    %210 = vector.broadcast %209 : vector<16x1xf32> to vector<16x32xf32>
    %211 = arith.mulf %206, %210 : vector<16x32xf32>
    %212 = vector.broadcast %192 : vector<1x32xf32> to vector<16x32xf32>
    %213 = arith.mulf %211, %212 : vector<16x32xf32>
    %214 = vector.broadcast %193 : vector<1x32xf32> to vector<16x32xf32>
    %215 = arith.addf %213, %214 : vector<16x32xf32>
    %c1_66 = arith.constant 1 : index
    %c0_67 = arith.constant 0 : index
    %c0_68 = arith.constant 0 : index
    %216 = vector.load %arg6[%c1_66, %c0_67, %c0_68] : memref<2x32x64xf32, #tpu.memory_space<vmem>>, vector<1x32x64xf32>
    %217 = vector.shape_cast %216 : vector<1x32x64xf32> to vector<32x64xf32>
    %cst_69 = arith.constant dense<0.000000e+00> : vector<16x64xf32>
    %218 = tpu.matmul %215, %217, %cst_69 {dimension_numbers = #tpu.dot_dimension_numbers<[1], [0], [0], [1], [0, 0, 1, 1], [], []>} : vector<16x32xf32>, vector<32x64xf32>, vector<16x64xf32> -> vector<16x64xf32>
    %219 = vector.extract_strided_slice %152 {offsets = [6, 0], sizes = [1, 64], strides = [1, 1]} : vector<16x128xf32> to vector<1x64xf32>
    %220 = vector.broadcast %219 : vector<1x64xf32> to vector<16x64xf32>
    %221 = arith.addf %218, %220 : vector<16x64xf32>
    %cst_70 = arith.constant 5.000000e-01 : f32
    %222 = vector.broadcast %cst_70 : f32 to vector<16x64xf32>
    %223 = arith.mulf %222, %221 : vector<16x64xf32>
    %cst_71 = arith.constant 4.471500e-02 : f32
    %224 = vector.broadcast %cst_71 : f32 to vector<16x64xf32>
    %225 = arith.mulf %224, %221 : vector<16x64xf32>
    %226 = arith.mulf %225, %221 : vector<16x64xf32>
    %227 = arith.mulf %226, %221 : vector<16x64xf32>
    %228 = arith.addf %221, %227 : vector<16x64xf32>
    %cst_72 = arith.constant 0.797884583 : f32
    %229 = vector.broadcast %cst_72 : f32 to vector<16x64xf32>
    %230 = arith.mulf %229, %228 : vector<16x64xf32>
    %231 = math.tanh %230 : vector<16x64xf32>
    %cst_73 = arith.constant 1.000000e+00 : f32
    %232 = vector.broadcast %cst_73 : f32 to vector<16x64xf32>
    %233 = arith.addf %232, %231 : vector<16x64xf32>
    %234 = arith.mulf %223, %233 : vector<16x64xf32>
    %c1_74 = arith.constant 1 : index
    %c0_75 = arith.constant 0 : index
    %c0_76 = arith.constant 0 : index
    %235 = vector.load %arg7[%c1_74, %c0_75, %c0_76] : memref<2x64x32xf32, #tpu.memory_space<vmem>>, vector<1x64x32xf32>
    %236 = vector.shape_cast %235 : vector<1x64x32xf32> to vector<64x32xf32>
    %cst_77 = arith.constant dense<0.000000e+00> : vector<16x32xf32>
    %237 = tpu.matmul %234, %236, %cst_77 {dimension_numbers = #tpu.dot_dimension_numbers<[1], [0], [0], [1], [0, 0, 1, 1], [], []>} : vector<16x64xf32>, vector<64x32xf32>, vector<16x32xf32> -> vector<16x32xf32>
    %238 = vector.extract_strided_slice %152 {offsets = [5, 0], sizes = [1, 32], strides = [1, 1]} : vector<16x128xf32> to vector<1x32xf32>
    %239 = vector.broadcast %238 : vector<1x32xf32> to vector<16x32xf32>
    %240 = arith.addf %237, %239 : vector<16x32xf32>
    %241 = arith.addf %240, %215 : vector<16x32xf32>
    %242 = vector.extract_strided_slice %152 {offsets = [3, 0], sizes = [1, 32], strides = [1, 1]} : vector<16x128xf32> to vector<1x32xf32>
    %243 = vector.extract_strided_slice %152 {offsets = [4, 0], sizes = [1, 32], strides = [1, 1]} : vector<16x128xf32> to vector<1x32xf32>
    %cst_78 = arith.constant dense<0.000000e+00> : vector<16xf32>
    %244 = vector.multi_reduction <add>, %241, %cst_78 [1] : vector<16x32xf32> to vector<16xf32>
    %245 = vector.shape_cast %244 : vector<16xf32> to vector<16x1xf32>
    %cst_79 = arith.constant 3.200000e+01 : f32
    %246 = vector.broadcast %cst_79 : f32 to vector<16x1xf32>
    %247 = arith.divf %245, %246 : vector<16x1xf32>
    %248 = vector.broadcast %247 : vector<16x1xf32> to vector<16x32xf32>
    %249 = arith.subf %241, %248 : vector<16x32xf32>
    %250 = arith.mulf %249, %249 : vector<16x32xf32>
    %cst_80 = arith.constant dense<0.000000e+00> : vector<16xf32>
    %251 = vector.multi_reduction <add>, %250, %cst_80 [1] : vector<16x32xf32> to vector<16xf32>
    %252 = vector.shape_cast %251 : vector<16xf32> to vector<16x1xf32>
    %cst_81 = arith.constant 3.200000e+01 : f32
    %253 = vector.broadcast %cst_81 : f32 to vector<16x1xf32>
    %254 = arith.divf %252, %253 : vector<16x1xf32>
    %255 = vector.broadcast %247 : vector<16x1xf32> to vector<16x32xf32>
    %256 = arith.subf %241, %255 : vector<16x32xf32>
    %cst_82 = arith.constant 9.99999996E-13 : f32
    %257 = vector.broadcast %cst_82 : f32 to vector<16x1xf32>
    %258 = arith.addf %254, %257 : vector<16x1xf32>
    %259 = math.rsqrt %258 : vector<16x1xf32>
    %260 = vector.broadcast %259 : vector<16x1xf32> to vector<16x32xf32>
    %261 = arith.mulf %256, %260 : vector<16x32xf32>
    %262 = vector.broadcast %242 : vector<1x32xf32> to vector<16x32xf32>
    %263 = arith.mulf %261, %262 : vector<16x32xf32>
    %264 = vector.broadcast %243 : vector<1x32xf32> to vector<16x32xf32>
    %265 = arith.addf %263, %264 : vector<16x32xf32>
    %266 = vector.extract_strided_slice %265 {offsets = [0, 0], sizes = [2, 32], strides = [1, 1]} : vector<16x32xf32> to vector<2x32xf32>
    %267 = vector.extract_strided_slice %6 {offsets = [10, 0], sizes = [1, 32], strides = [1, 1]} : vector<16x128xf32> to vector<1x32xf32>
    %268 = vector.broadcast %267 : vector<1x32xf32> to vector<2x32xf32>
    %269 = arith.mulf %266, %268 : vector<2x32xf32>
    %cst_83 = arith.constant dense<0.000000e+00> : vector<2xf32>
    %270 = vector.multi_reduction <add>, %269, %cst_83 [1] : vector<2x32xf32> to vector<2xf32>
    %271 = vector.shape_cast %270 : vector<2xf32> to vector<2x1xf32>
    %272 = vector.extract_strided_slice %6 {offsets = [11, 0], sizes = [1, 1], strides = [1, 1]} : vector<16x128xf32> to vector<1x1xf32>
    %273 = vector.broadcast %272 : vector<1x1xf32> to vector<2x1xf32>
    %274 = arith.addf %271, %273 : vector<2x1xf32>
    %c16 = arith.constant 16 : index
    %c0_84 = arith.constant 0 : index
    %275 = vector.load %arg2[%c16, %c0_84] : memref<24x16xf32, #tpu.memory_space<vmem>>, vector<2x1xf32>
    %cst_85 = arith.constant 0.000000e+00 : f32
    %276 = vector.broadcast %cst_85 : f32 to vector<2x1xf32>
    %277 = arith.maximumf %274, %276 : vector<2x1xf32>
    %278 = arith.mulf %274, %275 : vector<2x1xf32>
    %279 = arith.subf %277, %278 : vector<2x1xf32>
    %280 = math.absf %274 : vector<2x1xf32>
    %cst_86 = arith.constant 0.000000e+00 : f32
    %281 = vector.broadcast %cst_86 : f32 to vector<2x1xf32>
    %282 = arith.subf %281, %280 : vector<2x1xf32>
    %283 = math.exp %282 : vector<2x1xf32>
    %cst_87 = arith.constant 1.000000e+00 : f32
    %284 = vector.broadcast %cst_87 : f32 to vector<2x1xf32>
    %285 = arith.addf %284, %283 : vector<2x1xf32>
    %286 = math.log %285 : vector<2x1xf32>
    %287 = arith.addf %279, %286 : vector<2x1xf32>
    %cst_88 = arith.constant dense<0.000000e+00> : vector<1xf32>
    %288 = vector.multi_reduction <add>, %287, %cst_88 [0] : vector<2x1xf32> to vector<1xf32>
    %289 = vector.shape_cast %288 : vector<1xf32> to vector<1x1xf32>
    %cst_89 = arith.constant 2.000000e+00 : f32
    %290 = vector.broadcast %cst_89 : f32 to vector<1x1xf32>
    %291 = arith.divf %289, %290 : vector<1x1xf32>
    %cst_90 = arith.constant 0.000000e+00 : f32
    %292 = vector.broadcast %cst_90 : f32 to vector<8x128xf32>
    %c0_91 = arith.constant 0 : index
    %c0_92 = arith.constant 0 : index
    %293 = vector.load %arg8[%c0_91, %c0_92] : memref<8x128xf32, #tpu.memory_space<vmem>>, vector<8x128xf32>
    tpu.vector_store %arg8[%c0_91, %c0_92], %292 {strides = array<i32>} : memref<8x128xf32, #tpu.memory_space<vmem>>, vector<8x128xf32>,
    %294 = vector.shape_cast %274 : vector<2x1xf32> to vector<2x1xf32>
    %295 = vector.broadcast %294 : vector<2x1xf32> to vector<2x128xf32>
    %c0_93 = arith.constant 0 : index
    %c0_94 = arith.constant 0 : index
    %296 = vector.load %arg8[%c0_93, %c0_94] : memref<8x128xf32, #tpu.memory_space<vmem>>, vector<2x128xf32>
    tpu.vector_store %arg8[%c0_93, %c0_94], %295 {strides = array<i32>} : memref<8x128xf32, #tpu.memory_space<vmem>>, vector<2x128xf32>,
    %297 = vector.shape_cast %291 : vector<1x1xf32> to vector<1x1xf32>
    %298 = vector.broadcast %297 : vector<1x1xf32> to vector<1x128xf32>
    %c2 = arith.constant 2 : index
    %c0_95 = arith.constant 0 : index
    %299 = vector.load %arg8[%c2, %c0_95] : memref<8x128xf32, #tpu.memory_space<vmem>>, vector<1x128xf32>
    tpu.vector_store %arg8[%c2, %c0_95], %298 {strides = array<i32>} : memref<8x128xf32, #tpu.memory_space<vmem>>, vector<1x128xf32>,
    return
  }
  func.func @transform_0(%arg0: i32) -> (i32, i32) {
    %c0_i32 = arith.constant 0 : i32
    %c0_i32_0 = arith.constant 0 : i32
    %c0_i32_1 = arith.constant 0 : i32
    return %c0_i32, %c0_i32_0 : i32, i32
  }
  func.func @transform_1(%arg0: i32) -> (i32, i32) {
    %c0_i32 = arith.constant 0 : i32
    %c0_i32_0 = arith.constant 0 : i32
    %c0_i32_1 = arith.constant 0 : i32
    return %c0_i32, %c0_i32_0 : i32, i32
  }
  func.func @transform_2(%arg0: i32) -> (i32, i32, i32) {
    %c0_i32 = arith.constant 0 : i32
    %c0_i32_0 = arith.constant 0 : i32
    %c0_i32_1 = arith.constant 0 : i32
    %c0_i32_2 = arith.constant 0 : i32
    return %c0_i32, %c0_i32_0, %c0_i32_1 : i32, i32, i32
  }
  func.func @transform_3(%arg0: i32) -> (i32, i32, i32) {
    %c0_i32 = arith.constant 0 : i32
    %c0_i32_0 = arith.constant 0 : i32
    %c0_i32_1 = arith.constant 0 : i32
    %c0_i32_2 = arith.constant 0 : i32
    return %c0_i32, %c0_i32_0, %c0_i32_1 : i32, i32, i32
  }
  func.func @transform_4(%arg0: i32) -> (i32, i32, i32) {
    %c0_i32 = arith.constant 0 : i32
    %c0_i32_0 = arith.constant 0 : i32
    %c0_i32_1 = arith.constant 0 : i32
    %c0_i32_2 = arith.constant 0 : i32
    return %c0_i32, %c0_i32_0, %c0_i32_1 : i32, i32, i32
  }
  func.func @transform_5(%arg0: i32) -> (i32, i32, i32) {
    %c0_i32 = arith.constant 0 : i32
    %c0_i32_0 = arith.constant 0 : i32
    %c0_i32_1 = arith.constant 0 : i32
    %c0_i32_2 = arith.constant 0 : i32
    return %c0_i32, %c0_i32_0, %c0_i32_1 : i32, i32, i32
  }
  func.func @transform_6(%arg0: i32) -> (i32, i32, i32) {
    %c0_i32 = arith.constant 0 : i32
    %c0_i32_0 = arith.constant 0 : i32
    %c0_i32_1 = arith.constant 0 : i32
    %c0_i32_2 = arith.constant 0 : i32
    return %c0_i32, %c0_i32_0, %c0_i32_1 : i32, i32, i32
  }
  func.func @transform_7(%arg0: i32) -> (i32, i32) {
    %c0_i32 = arith.constant 0 : i32
    %c0_i32_0 = arith.constant 0 : i32
    %c0_i32_1 = arith.constant 0 : i32
    return %c0_i32, %c0_i32_0 : i32, i32
  }
}

</mosaic_0001>

<llo_original>
// kernel: biobert_ner_forward.1
$region0: #{biobert_ner_forward.1}
  #allocation0 [shape = 'u32[]', space=smem, size = 0x4, offset = 0x4, fixed_abs, tag = 'smem constant byte address 0x4 - core index']
  #allocation1 [shape = 'u32[72,128]{1,0:T(1,128)}', space=vmem, size = 0x9000, scoped, tag = 'internal scratch']
  %s0 = inlined_call_operand.vmem [shape: f32[16,32], index: 0, kind: input, shape index: {}]
  %s1 = inlined_call_operand.vmem [shape: f32[24,16], index: 1, kind: input, shape index: {}]
  %s2 = inlined_call_operand.vmem [shape: f32[4,1,32], index: 2, kind: input, shape index: {}]
  %s3 = inlined_call_operand.vmem [shape: f32[2,16,128], index: 3, kind: input, shape index: {}]
  %s4 = inlined_call_operand.vmem [shape: f32[2,32,128], index: 4, kind: input, shape index: {}]
  %s5 = inlined_call_operand.vmem [shape: f32[2,32,64], index: 5, kind: input, shape index: {}]
  %s6 = inlined_call_operand.vmem [shape: f32[2,64,32], index: 6, kind: input, shape index: {}]
  %s7 = inlined_call_operand.vmem [shape: f32[8,128], index: 7, kind: output, shape index: {}]
  %s8 = sld [smem:[#allocation0]]
  $region38: #{biobert_ner_forward.1} parent=0
    _
  %s10 = ssub.s32 1, %s8
  %s11 = scalar_select 0, %s10, %s8
  // Predicated region
  $region2: #{biobert_ner_forward.1} parent=0 // pred_check
    _
  $region3: #{biobert_ner_forward.1} parent=0 // pred_check_branch
    %13 = sbr.rel (0) target = $region5
  $region4: #{biobert_ner_forward.1} parent=0 // pred_region
    _
  $region5: #{biobert_ner_forward.1} parent=0 // pred_fallthru
    _
  // Predicated region
  $region6: #{biobert_ner_forward.1} parent=0 // pred_check
    _
  $region7: #{biobert_ner_forward.1} parent=0 // pred_check_branch
    %15 = sbr.rel (0) target = $region9
  $region8: #{biobert_ner_forward.1} parent=0 // pred_region
    _
  $region9: #{biobert_ner_forward.1} parent=0 // pred_fallthru
    _
  // Predicated region
  $region10: #{biobert_ner_forward.1} parent=0 // pred_check
    _
  $region11: #{biobert_ner_forward.1} parent=0 // pred_check_branch
    %17 = sbr.rel (0) target = $region13
  $region12: #{biobert_ner_forward.1} parent=0 // pred_region
    _
  $region13: #{biobert_ner_forward.1} parent=0 // pred_fallthru
    _
  // Predicated region
  $region14: #{biobert_ner_forward.1} parent=0 // pred_check
    _
  $region15: #{biobert_ner_forward.1} parent=0 // pred_check_branch
    %19 = sbr.rel (0) target = $region17
  $region16: #{biobert_ner_forward.1} parent=0 // pred_region
    _
  $region17: #{biobert_ner_forward.1} parent=0 // pred_fallthru
    _
  // Predicated region
  $region18: #{biobert_ner_forward.1} parent=0 // pred_check
    _
  $region19: #{biobert_ner_forward.1} parent=0 // pred_check_branch
    %21 = sbr.rel (0) target = $region21
  $region20: #{biobert_ner_forward.1} parent=0 // pred_region
    _
  $region21: #{biobert_ner_forward.1} parent=0 // pred_fallthru
    _
  // Predicated region
  $region22: #{biobert_ner_forward.1} parent=0 // pred_check
    _
  $region23: #{biobert_ner_forward.1} parent=0 // pred_check_branch
    %23 = sbr.rel (0) target = $region25
  $region24: #{biobert_ner_forward.1} parent=0 // pred_region
    _
  $region25: #{biobert_ner_forward.1} parent=0 // pred_fallthru
    _
  // Predicated region
  $region26: #{biobert_ner_forward.1} parent=0 // pred_check
    _
  $region27: #{biobert_ner_forward.1} parent=0 // pred_check_branch
    %25 = sbr.rel (0) target = $region29
  $region28: #{biobert_ner_forward.1} parent=0 // pred_region
    _
  $region29: #{biobert_ner_forward.1} parent=0 // pred_fallthru
    _
  %v26 = vld [vmem:[%s2] sm:$0x1]
  %v27 = vld [vmem:[%s2 + $0x1] sm:$0x1]
  %v28 = vld [vmem:[%s2 + $0x2] sm:$0x1]
  %v29 = vld [vmem:[%s2 + $0x3] sm:$0x1]
  %v30 = vmul.f32 %v26, 0.35355338
  %v31 = vmul.f32 %v27, 0.35355338
  %v32 = vmul.f32 %v28, 0.35355338
  %v33 = vmul.f32 %v29, 0.35355338
  %v34 = vld [vmem:[%s1] sm:$0xff]
  %v35 = vld [vmem:[%s1 + $0x8] sm:$0xff]
  %v36 = vld [vmem:[%s3] sm:$0xff]
  %v37 = vld [vmem:[%s3 + $0x8] sm:$0xff]
  %v38 = vld [vmem:[%s0] sm:$0xff]
  %v39 = vld [vmem:[%s0 + $0x8] sm:$0xff]
  %vm40 = vcmask 261120
  %v41 = vsel %vm40, %v38, 0.0
  %42 = vadd.xlane.f32.xlu0 %v41
  %v43 = vpop.xlane.xlu0 %42
  %v44 = vsel %vm40, %v39, 0.0
  %45 = vadd.xlane.f32.xlu0 %v44
  %v46 = vpop.xlane.xlu0 %45
  %v47 = vrcp.pop 32.0
  %v48 = vmul.f32 32.0, %v47
  %v49 = vsub.f32 1.0, %v48
  %v50 = vmul.f32 %v47, %v49
  %v51 = vadd.f32 %v47, %v50
  %vm52 = vweird.f32 %v47
  %v53 = vsel %vm52, %v47, %v51
  %v54 = vmul.f32 %v43, %v53
  %v55 = vmul.f32 %v46, %v53
  %v56 = vsub.f32 %v38, %v54
  %v57 = vsub.f32 %v39, %v55
  %v58 = vmul.f32 %v56, %v56
  %v59 = vmul.f32 %v57, %v57
  %v60 = vsel %vm40, %v58, 0.0
  %61 = vadd.xlane.f32.xlu0 %v60
  %v62 = vpop.xlane.xlu0 %61
  %v63 = vsel %vm40, %v59, 0.0
  %64 = vadd.xlane.f32.xlu0 %v63
  %v65 = vpop.xlane.xlu0 %64
  %v66 = vmul.f32 %v62, %v53
  %v67 = vmul.f32 %v65, %v53
  %v68 = vadd.f32 %v66, 1e-12
  %v69 = vadd.f32 %v67, 1e-12
  %v70 = vrsqrt.pop %v68
  %v71 = vmul.f32 %v70, %v68
  %v72 = vmul.f32 %v71, %v70
  %v73 = vmul.f32 0.5, %v72
  %v74 = vsub.f32 1.5, %v73
  %v75 = vmul.f32 %v70, %v74
  %vm76 = vweird.f32 %v68
  %vm77 = vweird.f32 %v70
  %vm78 = vmor %vm76, %vm77
  %v79 = vsel %vm78, %v70, %v75
  %v80 = vrsqrt.pop %v69
  %v81 = vmul.f32 %v80, %v69
  %v82 = vmul.f32 %v81, %v80
  %v83 = vmul.f32 0.5, %v82
  %v84 = vsub.f32 1.5, %v83
  %v85 = vmul.f32 %v80, %v84
  %vm86 = vweird.f32 %v69
  %vm87 = vweird.f32 %v80
  %vm88 = vmor %vm86, %vm87
  %v89 = vsel %vm88, %v80, %v85
  %v90 = vmul.f32 %v56, %v79
  %v91 = vmul.f32 %v57, %v89
  %v92 = vperm.slane %v37, 0
  %v93 = vmul.f32 %v90, %v92
  %v94 = vmul.f32 %v91, %v92
  %v95 = vperm.slane %v37, 1
  %v96 = vadd.f32 %v93, %v95
  %v97 = vadd.f32 %v94, %v95
  %v98 = vld [vmem:[%s4] sm:$0xff]
  %v99 = vld [vmem:[%s4 + $0x8] sm:$0xff]
  %v100 = vld [vmem:[%s4 + $0x10] sm:$0xff]
  %v101 = vld [vmem:[%s4 + $0x18] sm:$0xff]
  %v102 = vperm.slane %v36, 0
  %v104 = vsel %vm40, %v96, 0
  %v107 = vsel %vm40, %v97, 0
  %109 = vmatpush.msra.mxu0 0.0
  %110 = vmatpush.msra.mxu0 0.0
  %111 = vmatpush.msra.mxu0 0.0
  %112 = vmatpush.msra.mxu0 0.0
  %113 = vmatpush.msra.mxu0 0.0
  %114 = vmatpush.msra.mxu0 0.0
  %115 = vmatpush.msra.mxu0 0.0
  %116 = vmatpush.msra.mxu0 0.0
  %117 = vmatpush.msra.mxu0 0.0
  %118 = vmatpush.msra.mxu0 0.0
  %119 = vmatpush.msra.mxu0 0.0
  %120 = vmatpush.msra.mxu0 0.0
  %121 = vmatpush.msra.mxu0 %v101
  %122 = vmatpush.msra.mxu0 %v100
  %123 = vmatpush.msra.mxu0 %v99
  %124 = vmatpush.msra.mxu0 %v98
  %125 = vmatmul.f32.gmra.mxu0 %v104
  %v126 = vpop.f32.mrf.mxu0
  %v127 = vadd.f32 %v102, %v126
  %128 = vmatmul.f32.gmra.mxu0 %v107
  %v129 = vpop.f32.mrf.mxu0
  %v130 = vadd.f32 %v102, %v129
  %131 = vdwg.mxu0
  %v136 = vperm.slane %v30, 0
  %v137 = vperm.slane %v31, 0
  %v138 = vperm.slane %v32, 0
  %v139 = vperm.slane %v33, 0
  %v144 = vmul.f32 %v127, %v136
  %v145 = vmul.f32 %v130, %v136
  %v146 = vmul.f32 %v127, %v137
  %v147 = vmul.f32 %v130, %v137
  %v148 = vmul.f32 %v127, %v138
  %v149 = vmul.f32 %v130, %v138
  %v150 = vmul.f32 %v127, %v139
  %v151 = vmul.f32 %v130, %v139
  %v156 = vperm.slane %v26, 0
  %v157 = vperm.slane %v27, 0
  %v158 = vperm.slane %v28, 0
  %v159 = vperm.slane %v29, 0
  %160 = vrot.lane.b32.xlu0 %v156, 64
  %v161 = vpop.permute.xlu0 %160
  %162 = vrot.lane.b32.xlu0 %v157, 64
  %v163 = vpop.permute.xlu0 %162
  %164 = vrot.lane.b32.xlu0 %v158, 64
  %v165 = vpop.permute.xlu0 %164
  %166 = vrot.lane.b32.xlu0 %v159, 64
  %v167 = vpop.permute.xlu0 %166
  %v172 = vmul.f32 %v127, %v161
  %v173 = vmul.f32 %v130, %v161
  %v174 = vmul.f32 %v127, %v163
  %v175 = vmul.f32 %v130, %v163
  %v176 = vmul.f32 %v127, %v165
  %v177 = vmul.f32 %v130, %v165
  %v178 = vmul.f32 %v127, %v167
  %v179 = vmul.f32 %v130, %v167
  %182 = vrot.lane.b32.xlu0 %v127, 96
  %v183 = vpop.permute.xlu0 %182
  %184 = vrot.lane.b32.xlu0 %v130, 96
  %v185 = vpop.permute.xlu0 %184
  %v187 = vsel %vm40, %v144, 0
  %v190 = vsel %vm40, %v145, 0
  %v192 = vsel %vm40, %v183, 0
  %v194 = vsel %vm40, %v185, 0
  %196 = vmatpush.xpose.msra.mxu0 0.0
  %197 = vmatpush.xpose.msra.mxu0 0.0
  %198 = vmatpush.xpose.msra.mxu0 0.0
  %199 = vmatpush.xpose.msra.mxu0 0.0
  %200 = vmatpush.xpose.msra.mxu0 0.0
  %201 = vmatpush.xpose.msra.mxu0 0.0
  %202 = vmatpush.xpose.msra.mxu0 0.0
  %203 = vmatpush.xpose.msra.mxu0 0.0
  %204 = vmatpush.xpose.msra.mxu0 0.0
  %205 = vmatpush.xpose.msra.mxu0 0.0
  %206 = vmatpush.xpose.msra.mxu0 0.0
  %207 = vmatpush.xpose.msra.mxu0 0.0
  %208 = vmatpush.xpose.msra.mxu0 0.0
  %209 = vmatpush.xpose.msra.mxu0 0.0
  %210 = vmatpush.xpose.msra.mxu0 %v194
  %211 = vmatpush.xpose.msra.mxu0 %v192
  %212 = vmatmul.f32.gmra.mxu0 %v187
  %v213 = vpop.f32.mrf.mxu0
  %v214 = vadd.f32 %v34, %v213
  %215 = vmatmul.f32.gmra.mxu0 %v190
  %v216 = vpop.f32.mrf.mxu0
  %v217 = vadd.f32 %v35, %v216
  %218 = vdwg.mxu0
  %v220 = vsel %vm40, %v146, 0
  %v223 = vsel %vm40, %v147, 0
  %225 = vmatpush.xpose.msra.mxu0 0.0
  %226 = vmatpush.xpose.msra.mxu0 0.0
  %227 = vmatpush.xpose.msra.mxu0 0.0
  %228 = vmatpush.xpose.msra.mxu0 0.0
  %229 = vmatpush.xpose.msra.mxu0 0.0
  %230 = vmatpush.xpose.msra.mxu0 0.0
  %231 = vmatpush.xpose.msra.mxu0 0.0
  %232 = vmatpush.xpose.msra.mxu0 0.0
  %233 = vmatpush.xpose.msra.mxu0 0.0
  %234 = vmatpush.xpose.msra.mxu0 0.0
  %235 = vmatpush.xpose.msra.mxu0 0.0
  %236 = vmatpush.xpose.msra.mxu0 0.0
  %237 = vmatpush.xpose.msra.mxu0 0.0
  %238 = vmatpush.xpose.msra.mxu0 0.0
  %239 = vmatpush.xpose.msra.mxu0 %v194
  %240 = vmatpush.xpose.msra.mxu0 %v192
  %241 = vmatmul.f32.gmra.mxu0 %v220
  %v242 = vpop.f32.mrf.mxu0
  %v243 = vadd.f32 %v34, %v242
  %244 = vmatmul.f32.gmra.mxu0 %v223
  %v245 = vpop.f32.mrf.mxu0
  %v246 = vadd.f32 %v35, %v245
  %247 = vdwg.mxu0
  %v249 = vsel %vm40, %v148, 0
  %v252 = vsel %vm40, %v149, 0
  %254 = vmatpush.xpose.msra.mxu0 0.0
  %255 = vmatpush.xpose.msra.mxu0 0.0
  %256 = vmatpush.xpose.msra.mxu0 0.0
  %257 = vmatpush.xpose.msra.mxu0 0.0
  %258 = vmatpush.xpose.msra.mxu0 0.0
  %259 = vmatpush.xpose.msra.mxu0 0.0
  %260 = vmatpush.xpose.msra.mxu0 0.0
  %261 = vmatpush.xpose.msra.mxu0 0.0
  %262 = vmatpush.xpose.msra.mxu0 0.0
  %263 = vmatpush.xpose.msra.mxu0 0.0
  %264 = vmatpush.xpose.msra.mxu0 0.0
  %265 = vmatpush.xpose.msra.mxu0 0.0
  %266 = vmatpush.xpose.msra.mxu0 0.0
  %267 = vmatpush.xpose.msra.mxu0 0.0
  %268 = vmatpush.xpose.msra.mxu0 %v194
  %269 = vmatpush.xpose.msra.mxu0 %v192
  %270 = vmatmul.f32.gmra.mxu0 %v249
  %v271 = vpop.f32.mrf.mxu0
  %v272 = vadd.f32 %v34, %v271
  %273 = vmatmul.f32.gmra.mxu0 %v252
  %v274 = vpop.f32.mrf.mxu0
  %v275 = vadd.f32 %v35, %v274
  %276 = vdwg.mxu0
  %v278 = vsel %vm40, %v150, 0
  %v281 = vsel %vm40, %v151, 0
  %283 = vmatpush.xpose.msra.mxu0 0.0
  %284 = vmatpush.xpose.msra.mxu0 0.0
  %285 = vmatpush.xpose.msra.mxu0 0.0
  %286 = vmatpush.xpose.msra.mxu0 0.0
  %287 = vmatpush.xpose.msra.mxu0 0.0
  %288 = vmatpush.xpose.msra.mxu0 0.0
  %289 = vmatpush.xpose.msra.mxu0 0.0
  %290 = vmatpush.xpose.msra.mxu0 0.0
  %291 = vmatpush.xpose.msra.mxu0 0.0
  %292 = vmatpush.xpose.msra.mxu0 0.0
  %293 = vmatpush.xpose.msra.mxu0 0.0
  %294 = vmatpush.xpose.msra.mxu0 0.0
  %295 = vmatpush.xpose.msra.mxu0 0.0
  %296 = vmatpush.xpose.msra.mxu0 0.0
  %297 = vmatpush.xpose.msra.mxu0 %v194
  %298 = vmatpush.xpose.msra.mxu0 %v192
  %299 = vmatmul.f32.gmra.mxu0 %v278
  %v300 = vpop.f32.mrf.mxu0
  %v301 = vadd.f32 %v34, %v300
  %302 = vmatmul.f32.gmra.mxu0 %v281
  %v303 = vpop.f32.mrf.mxu0
  %v304 = vadd.f32 %v35, %v303
  %305 = vdwg.mxu0
  %vm306 = vcmask 130048
  %v307 = vsel %vm306, %v214, -inf
  %308 = vmax.xlane.f32.xlu0 %v307
  %v309 = vpop.xlane.xlu0 %308
  %v310 = vsel %vm306, %v217, -inf
  %311 = vmax.xlane.f32.xlu0 %v310
  %v312 = vpop.xlane.xlu0 %311
  %v313 = vsel %vm306, %v243, -inf
  %314 = vmax.xlane.f32.xlu0 %v313
  %v315 = vpop.xlane.xlu0 %314
  %v316 = vsel %vm306, %v246, -inf
  %317 = vmax.xlane.f32.xlu0 %v316
  %v318 = vpop.xlane.xlu0 %317
  %v319 = vsel %vm306, %v272, -inf
  %320 = vmax.xlane.f32.xlu0 %v319
  %v321 = vpop.xlane.xlu0 %320
  %v322 = vsel %vm306, %v275, -inf
  %323 = vmax.xlane.f32.xlu0 %v322
  %v324 = vpop.xlane.xlu0 %323
  %v325 = vsel %vm306, %v301, -inf
  %326 = vmax.xlane.f32.xlu0 %v325
  %v327 = vpop.xlane.xlu0 %326
  %v328 = vsel %vm306, %v304, -inf
  %329 = vmax.xlane.f32.xlu0 %v328
  %v330 = vpop.xlane.xlu0 %329
  %v331 = vsub.f32 %v214, %v309
  %v332 = vsub.f32 %v217, %v312
  %v333 = vsub.f32 %v243, %v315
  %v334 = vsub.f32 %v246, %v318
  %v335 = vsub.f32 %v272, %v321
  %v336 = vsub.f32 %v275, %v324
  %v337 = vsub.f32 %v301, %v327
  %v338 = vsub.f32 %v304, %v330
  %v339 = vmul.f32 %v331, 1.442695
  %v340 = vpow.pop %v339
  %v341 = vmul.f32 %v332, 1.442695
  %v342 = vpow.pop %v341
  %v343 = vmul.f32 %v333, 1.442695
  %v344 = vpow.pop %v343
  %v345 = vmul.f32 %v334, 1.442695
  %v346 = vpow.pop %v345
  %v347 = vmul.f32 %v335, 1.442695
  %v348 = vpow.pop %v347
  %v349 = vmul.f32 %v336, 1.442695
  %v350 = vpow.pop %v349
  %v351 = vmul.f32 %v337, 1.442695
  %v352 = vpow.pop %v351
  %v353 = vmul.f32 %v338, 1.442695
  %v354 = vpow.pop %v353
  %v355 = vsel %vm306, %v340, 0.0
  %356 = vadd.xlane.f32.xlu0 %v355
  %v357 = vpop.xlane.xlu0 %356
  %v358 = vsel %vm306, %v342, 0.0
  %359 = vadd.xlane.f32.xlu0 %v358
  %v360 = vpop.xlane.xlu0 %359
  %v361 = vsel %vm306, %v344, 0.0
  %362 = vadd.xlane.f32.xlu0 %v361
  %v363 = vpop.xlane.xlu0 %362
  %v364 = vsel %vm306, %v346, 0.0
  %365 = vadd.xlane.f32.xlu0 %v364
  %v366 = vpop.xlane.xlu0 %365
  %v367 = vsel %vm306, %v348, 0.0
  %368 = vadd.xlane.f32.xlu0 %v367
  %v369 = vpop.xlane.xlu0 %368
  %v370 = vsel %vm306, %v350, 0.0
  %371 = vadd.xlane.f32.xlu0 %v370
  %v372 = vpop.xlane.xlu0 %371
  %v373 = vsel %vm306, %v352, 0.0
  %374 = vadd.xlane.f32.xlu0 %v373
  %v375 = vpop.xlane.xlu0 %374
  %v376 = vsel %vm306, %v354, 0.0
  %377 = vadd.xlane.f32.xlu0 %v376
  %v378 = vpop.xlane.xlu0 %377
  %v379 = vrcp.pop %v357
  %v380 = vrcp.pop %v360
  %v381 = vrcp.pop %v363
  %v382 = vrcp.pop %v366
  %v383 = vrcp.pop %v369
  %v384 = vrcp.pop %v372
  %v385 = vrcp.pop %v375
  %v386 = vrcp.pop %v378
  %v387 = vmul.f32 %v340, %v379
  %v388 = vmul.f32 %v342, %v380
  %v389 = vmul.f32 %v344, %v381
  %v390 = vmul.f32 %v346, %v382
  %v391 = vmul.f32 %v348, %v383
  %v392 = vmul.f32 %v350, %v384
  %v393 = vmul.f32 %v352, %v385
  %v394 = vmul.f32 %v354, %v386
  %397 = vrot.lane.b32.xlu0 %v172, 64
  %v398 = vpop.permute.xlu0 %397
  %399 = vrot.lane.b32.xlu0 %v173, 64
  %v400 = vpop.permute.xlu0 %399
  %v404 = vsel %vm306, %v387, 0
  %v407 = vsel %vm306, %v388, 0
  %409 = vmatpush.msra.mxu0 0.0
  %410 = vmatpush.msra.mxu0 0.0
  %411 = vmatpush.msra.mxu0 0.0
  %412 = vmatpush.msra.mxu0 0.0
  %413 = vmatpush.msra.mxu0 0.0
  %414 = vmatpush.msra.mxu0 0.0
  %415 = vmatpush.msra.mxu0 0.0
  %416 = vmatpush.msra.mxu0 0.0
  %417 = vmatpush.msra.mxu0 0.0
  %418 = vmatpush.msra.mxu0 0.0
  %419 = vmatpush.msra.mxu0 0.0
  %420 = vmatpush.msra.mxu0 0.0
  %421 = vmatpush.msra.mxu0 0.0
  %422 = vmatpush.msra.mxu0 0.0
  %423 = vmatpush.msra.mxu0 %v400
  %424 = vmatpush.msra.mxu0 %v398
  %425 = vmatmul.f32.gmra.mxu0 %v404
  %v426 = vpop.f32.mrf.mxu0
  %v427 = vadd.f32 0.0, %v426
  %428 = vmatmul.f32.gmra.mxu0 %v407
  %v429 = vpop.f32.mrf.mxu0
  %v430 = vadd.f32 0.0, %v429
  %431 = vdwg.mxu0
  %434 = vrot.lane.b32.xlu0 %v174, 64
  %v435 = vpop.permute.xlu0 %434
  %436 = vrot.lane.b32.xlu0 %v175, 64
  %v437 = vpop.permute.xlu0 %436
  %v441 = vsel %vm306, %v389, 0
  %v444 = vsel %vm306, %v390, 0
  %446 = vmatpush.msra.mxu0 0.0
  %447 = vmatpush.msra.mxu0 0.0
  %448 = vmatpush.msra.mxu0 0.0
  %449 = vmatpush.msra.mxu0 0.0
  %450 = vmatpush.msra.mxu0 0.0
  %451 = vmatpush.msra.mxu0 0.0
  %452 = vmatpush.msra.mxu0 0.0
  %453 = vmatpush.msra.mxu0 0.0
  %454 = vmatpush.msra.mxu0 0.0
  %455 = vmatpush.msra.mxu0 0.0
  %456 = vmatpush.msra.mxu0 0.0
  %457 = vmatpush.msra.mxu0 0.0
  %458 = vmatpush.msra.mxu0 0.0
  %459 = vmatpush.msra.mxu0 0.0
  %460 = vmatpush.msra.mxu0 %v437
  %461 = vmatpush.msra.mxu0 %v435
  %462 = vmatmul.f32.gmra.mxu0 %v441
  %v463 = vpop.f32.mrf.mxu0
  %v464 = vadd.f32 0.0, %v463
  %465 = vmatmul.f32.gmra.mxu0 %v444
  %v466 = vpop.f32.mrf.mxu0
  %v467 = vadd.f32 0.0, %v466
  %468 = vdwg.mxu0
  %471 = vrot.lane.b32.xlu0 %v176, 64
  %v472 = vpop.permute.xlu0 %471
  %473 = vrot.lane.b32.xlu0 %v177, 64
  %v474 = vpop.permute.xlu0 %473
  %v478 = vsel %vm306, %v391, 0
  %v481 = vsel %vm306, %v392, 0
  %483 = vmatpush.msra.mxu0 0.0
  %484 = vmatpush.msra.mxu0 0.0
  %485 = vmatpush.msra.mxu0 0.0
  %486 = vmatpush.msra.mxu0 0.0
  %487 = vmatpush.msra.mxu0 0.0
  %488 = vmatpush.msra.mxu0 0.0
  %489 = vmatpush.msra.mxu0 0.0
  %490 = vmatpush.msra.mxu0 0.0
  %491 = vmatpush.msra.mxu0 0.0
  %492 = vmatpush.msra.mxu0 0.0
  %493 = vmatpush.msra.mxu0 0.0
  %494 = vmatpush.msra.mxu0 0.0
  %495 = vmatpush.msra.mxu0 0.0
  %496 = vmatpush.msra.mxu0 0.0
  %497 = vmatpush.msra.mxu0 %v474
  %498 = vmatpush.msra.mxu0 %v472
  %499 = vmatmul.f32.gmra.mxu0 %v478
  %v500 = vpop.f32.mrf.mxu0
  %v501 = vadd.f32 0.0, %v500
  %502 = vmatmul.f32.gmra.mxu0 %v481
  %v503 = vpop.f32.mrf.mxu0
  %v504 = vadd.f32 0.0, %v503
  %505 = vdwg.mxu0
  %508 = vrot.lane.b32.xlu0 %v178, 64
  %v509 = vpop.permute.xlu0 %508
  %510 = vrot.lane.b32.xlu0 %v179, 64
  %v511 = vpop.permute.xlu0 %510
  %v515 = vsel %vm306, %v393, 0
  %v518 = vsel %vm306, %v394, 0
  %520 = vmatpush.msra.mxu0 0.0
  %521 = vmatpush.msra.mxu0 0.0
  %522 = vmatpush.msra.mxu0 0.0
  %523 = vmatpush.msra.mxu0 0.0
  %524 = vmatpush.msra.mxu0 0.0
  %525 = vmatpush.msra.mxu0 0.0
  %526 = vmatpush.msra.mxu0 0.0
  %527 = vmatpush.msra.mxu0 0.0
  %528 = vmatpush.msra.mxu0 0.0
  %529 = vmatpush.msra.mxu0 0.0
  %530 = vmatpush.msra.mxu0 0.0
  %531 = vmatpush.msra.mxu0 0.0
  %532 = vmatpush.msra.mxu0 0.0
  %533 = vmatpush.msra.mxu0 0.0
  %534 = vmatpush.msra.mxu0 %v511
  %535 = vmatpush.msra.mxu0 %v509
  %536 = vmatmul.f32.gmra.mxu0 %v515
  %v537 = vpop.f32.mrf.mxu0
  %v538 = vadd.f32 0.0, %v537
  %539 = vmatmul.f32.gmra.mxu0 %v518
  %v540 = vpop.f32.mrf.mxu0
  %v541 = vadd.f32 0.0, %v540
  %542 = vdwg.mxu0
  %v543 = vsel %vm40, %v427, 0.0
  %v544 = vsel %vm40, %v464, 0.0
  %v545 = vadd.f32 %v543, %v544
  %v546 = vsel %vm40, %v501, 0.0
  %v547 = vadd.f32 %v545, %v546
  %v548 = vsel %vm40, %v538, 0.0
  %v549 = vadd.f32 %v547, %v548
  %v550 = vsel %vm40, %v430, 0.0
  %v551 = vsel %vm40, %v467, 0.0
  %v552 = vadd.f32 %v550, %v551
  %v553 = vsel %vm40, %v504, 0.0
  %v554 = vadd.f32 %v552, %v553
  %v555 = vsel %vm40, %v541, 0.0
  %v556 = vadd.f32 %v554, %v555
  %561 = vrot.lane.b32.xlu0 %v98, 32
  %v562 = vpop.permute.xlu0 %561
  %563 = vrot.lane.b32.xlu0 %v99, 32
  %v564 = vpop.permute.xlu0 %563
  %565 = vrot.lane.b32.xlu0 %v100, 32
  %v566 = vpop.permute.xlu0 %565
  %567 = vrot.lane.b32.xlu0 %v101, 32
  %v568 = vpop.permute.xlu0 %567
  %574 = vrot.lane.b32.xlu0 %v102, 32
  %v575 = vpop.permute.xlu0 %574
  %v578 = vsel %vm40, %v549, 0
  %v581 = vsel %vm40, %v556, 0
  %583 = vmatpush.msra.mxu0 0.0
  %584 = vmatpush.msra.mxu0 0.0
  %585 = vmatpush.msra.mxu0 0.0
  %586 = vmatpush.msra.mxu0 0.0
  %587 = vmatpush.msra.mxu0 0.0
  %588 = vmatpush.msra.mxu0 0.0
  %589 = vmatpush.msra.mxu0 0.0
  %590 = vmatpush.msra.mxu0 0.0
  %591 = vmatpush.msra.mxu0 0.0
  %592 = vmatpush.msra.mxu0 0.0
  %593 = vmatpush.msra.mxu0 0.0
  %594 = vmatpush.msra.mxu0 0.0
  %595 = vmatpush.msra.mxu0 %v568
  %596 = vmatpush.msra.mxu0 %v566
  %597 = vmatpush.msra.mxu0 %v564
  %598 = vmatpush.msra.mxu0 %v562
  %599 = vmatmul.f32.gmra.mxu0 %v578
  %v600 = vpop.f32.mrf.mxu0
  %v601 = vadd.f32 %v575, %v600
  %602 = vmatmul.f32.gmra.mxu0 %v581
  %v603 = vpop.f32.mrf.mxu0
  %v604 = vadd.f32 %v575, %v603
  %605 = vdwg.mxu0
  %v606 = vadd.f32 %v601, %v96
  %v607 = vadd.f32 %v604, %v97
  %v608 = vsel %vm40, %v606, 0.0
  %609 = vadd.xlane.f32.xlu0 %v608
  %v610 = vpop.xlane.xlu0 %609
  %v611 = vsel %vm40, %v607, 0.0
  %612 = vadd.xlane.f32.xlu0 %v611
  %v613 = vpop.xlane.xlu0 %612
  %v614 = vmul.f32 %v610, %v53
  %v615 = vmul.f32 %v613, %v53
  %v616 = vsub.f32 %v606, %v614
  %v617 = vsub.f32 %v607, %v615
  %v618 = vmul.f32 %v616, %v616
  %v619 = vmul.f32 %v617, %v617
  %v620 = vsel %vm40, %v618, 0.0
  %621 = vadd.xlane.f32.xlu0 %v620
  %v622 = vpop.xlane.xlu0 %621
  %v623 = vsel %vm40, %v619, 0.0
  %624 = vadd.xlane.f32.xlu0 %v623
  %v625 = vpop.xlane.xlu0 %624
  %v626 = vmul.f32 %v622, %v53
  %v627 = vmul.f32 %v625, %v53
  %v628 = vadd.f32 %v626, 1e-12
  %v629 = vadd.f32 %v627, 1e-12
  %v630 = vrsqrt.pop %v628
  %v631 = vmul.f32 %v630, %v628
  %v632 = vmul.f32 %v631, %v630
  %v633 = vmul.f32 0.5, %v632
  %v634 = vsub.f32 1.5, %v633
  %v635 = vmul.f32 %v630, %v634
  %vm636 = vweird.f32 %v628
  %vm637 = vweird.f32 %v630
  %vm638 = vmor %vm636, %vm637
  %v639 = vsel %vm638, %v630, %v635
  %v640 = vrsqrt.pop %v629
  %v641 = vmul.f32 %v640, %v629
  %v642 = vmul.f32 %v641, %v640
  %v643 = vmul.f32 0.5, %v642
  %v644 = vsub.f32 1.5, %v643
  %v645 = vmul.f32 %v640, %v644
  %vm646 = vweird.f32 %v629
  %vm647 = vweird.f32 %v640
  %vm648 = vmor %vm646, %vm647
  %v649 = vsel %vm648, %v640, %v645
  %v650 = vmul.f32 %v616, %v639
  %v651 = vmul.f32 %v617, %v649
  %v652 = vperm.slane %v36, 1
  %v653 = vmul.f32 %v650, %v652
  %v654 = vmul.f32 %v651, %v652
  %v655 = vperm.slane %v36, 2
  %v656 = vadd.f32 %v653, %v655
  %v657 = vadd.f32 %v654, %v655
  %v658 = vld [vmem:[%s5] sm:$0xff]
  %v659 = vld [vmem:[%s5 + $0x8] sm:$0xff]
  %v660 = vld [vmem:[%s5 + $0x10] sm:$0xff]
  %v661 = vld [vmem:[%s5 + $0x18] sm:$0xff]
  %v662 = vperm.slane %v36, 6
  %v664 = vsel %vm40, %v656, 0
  %v667 = vsel %vm40, %v657, 0
  %669 = vmatpush.msra.mxu0 0.0
  %670 = vmatpush.msra.mxu0 0.0
  %671 = vmatpush.msra.mxu0 0.0
  %672 = vmatpush.msra.mxu0 0.0
  %673 = vmatpush.msra.mxu0 0.0
  %674 = vmatpush.msra.mxu0 0.0
  %675 = vmatpush.msra.mxu0 0.0
  %676 = vmatpush.msra.mxu0 0.0
  %677 = vmatpush.msra.mxu0 0.0
  %678 = vmatpush.msra.mxu0 0.0
  %679 = vmatpush.msra.mxu0 0.0
  %680 = vmatpush.msra.mxu0 0.0
  %681 = vmatpush.msra.mxu0 %v661
  %682 = vmatpush.msra.mxu0 %v660
  %683 = vmatpush.msra.mxu0 %v659
  %684 = vmatpush.msra.mxu0 %v658
  %685 = vmatmul.f32.gmra.mxu0 %v664
  %v686 = vpop.f32.mrf.mxu0
  %v687 = vadd.f32 %v662, %v686
  %688 = vmatmul.f32.gmra.mxu0 %v667
  %v689 = vpop.f32.mrf.mxu0
  %v690 = vadd.f32 %v662, %v689
  %691 = vdwg.mxu0
  %v692 = vmul.f32 %v687, 0.5
  %v693 = vmul.f32 %v690, 0.5
  %v694 = vmul.f32 %v687, 0.044715
  %v695 = vmul.f32 %v690, 0.044715
  %v696 = vmul.f32 %v694, %v687
  %v697 = vmul.f32 %v695, %v690
  %v698 = vmul.f32 %v696, %v687
  %v699 = vmul.f32 %v697, %v690
  %v700 = vadd.f32 %v687, %v698
  %v701 = vadd.f32 %v690, %v699
  %v702 = vmul.f32 %v700, 0.7978846
  %v703 = vmul.f32 %v701, 0.7978846
  %v704 = vtanh.pop %v702
  %v705 = vtanh.pop %v703
  %v706 = vadd.f32 %v704, 1.0
  %v707 = vadd.f32 %v705, 1.0
  %v708 = vmul.f32 %v692, %v706
  %v709 = vmul.f32 %v693, %v707
  %v710 = vld [vmem:[%s6] sm:$0xff]
  %v711 = vld [vmem:[%s6 + $0x8] sm:$0xff]
  %v712 = vld [vmem:[%s6 + $0x10] sm:$0xff]
  %v713 = vld [vmem:[%s6 + $0x18] sm:$0xff]
  %v714 = vld [vmem:[%s6 + $0x20] sm:$0xff]
  %v715 = vld [vmem:[%s6 + $0x28] sm:$0xff]
  %v716 = vld [vmem:[%s6 + $0x30] sm:$0xff]
  %v717 = vld [vmem:[%s6 + $0x38] sm:$0xff]
  %v718 = vperm.slane %v36, 5
  %vm719 = vcmask 523264
  %v721 = vsel %vm719, %v708, 0
  %v724 = vsel %vm719, %v709, 0
  %726 = vmatpush.msra.mxu0 0.0
  %727 = vmatpush.msra.mxu0 0.0
  %728 = vmatpush.msra.mxu0 0.0
  %729 = vmatpush.msra.mxu0 0.0
  %730 = vmatpush.msra.mxu0 0.0
  %731 = vmatpush.msra.mxu0 0.0
  %732 = vmatpush.msra.mxu0 0.0
  %733 = vmatpush.msra.mxu0 0.0
  %734 = vmatpush.msra.mxu0 %v717
  %735 = vmatpush.msra.mxu0 %v716
  %736 = vmatpush.msra.mxu0 %v715
  %737 = vmatpush.msra.mxu0 %v714
  %738 = vmatpush.msra.mxu0 %v713
  %739 = vmatpush.msra.mxu0 %v712
  %740 = vmatpush.msra.mxu0 %v711
  %741 = vmatpush.msra.mxu0 %v710
  %742 = vmatmul.f32.gmra.mxu0 %v721
  %v743 = vpop.f32.mrf.mxu0
  %v744 = vadd.f32 %v718, %v743
  %745 = vmatmul.f32.gmra.mxu0 %v724
  %v746 = vpop.f32.mrf.mxu0
  %v747 = vadd.f32 %v718, %v746
  %748 = vdwg.mxu0
  %v749 = vadd.f32 %v744, %v656
  %v750 = vadd.f32 %v747, %v657
  %v751 = vsel %vm40, %v749, 0.0
  %752 = vadd.xlane.f32.xlu0 %v751
  %v753 = vpop.xlane.xlu0 %752
  %v754 = vsel %vm40, %v750, 0.0
  %755 = vadd.xlane.f32.xlu0 %v754
  %v756 = vpop.xlane.xlu0 %755
  %v757 = vmul.f32 %v753, %v53
  %v758 = vmul.f32 %v756, %v53
  %v759 = vsub.f32 %v749, %v757
  %v760 = vsub.f32 %v750, %v758
  %v761 = vmul.f32 %v759, %v759
  %v762 = vmul.f32 %v760, %v760
  %v763 = vsel %vm40, %v761, 0.0
  %764 = vadd.xlane.f32.xlu0 %v763
  %v765 = vpop.xlane.xlu0 %764
  %v766 = vsel %vm40, %v762, 0.0
  %767 = vadd.xlane.f32.xlu0 %v766
  %v768 = vpop.xlane.xlu0 %767
  %v769 = vmul.f32 %v765, %v53
  %v770 = vmul.f32 %v768, %v53
  %v771 = vadd.f32 %v769, 1e-12
  %v772 = vadd.f32 %v770, 1e-12
  %v773 = vrsqrt.pop %v771
  %v774 = vmul.f32 %v773, %v771
  %v775 = vmul.f32 %v774, %v773
  %v776 = vmul.f32 0.5, %v775
  %v777 = vsub.f32 1.5, %v776
  %v778 = vmul.f32 %v773, %v777
  %vm779 = vweird.f32 %v771
  %vm780 = vweird.f32 %v773
  %vm781 = vmor %vm779, %vm780
  %v782 = vsel %vm781, %v773, %v778
  %v783 = vrsqrt.pop %v772
  %v784 = vmul.f32 %v783, %v772
  %v785 = vmul.f32 %v784, %v783
  %v786 = vmul.f32 0.5, %v785
  %v787 = vsub.f32 1.5, %v786
  %v788 = vmul.f32 %v783, %v787
  %vm789 = vweird.f32 %v772
  %vm790 = vweird.f32 %v783
  %vm791 = vmor %vm789, %vm790
  %v792 = vsel %vm791, %v783, %v788
  %v793 = vmul.f32 %v759, %v782
  %v794 = vmul.f32 %v760, %v792
  %v795 = vperm.slane %v36, 3
  %v796 = vmul.f32 %v793, %v795
  %v797 = vmul.f32 %v794, %v795
  %v798 = vperm.slane %v36, 4
  %v799 = vadd.f32 %v796, %v798
  %v800 = vadd.f32 %v797, %v798
  %s801 = scalar_lea.vmem %s4, 32
  %v802 = vld [vmem:[%s801] sm:$0xff]
  %v803 = vld [vmem:[%s801 + $0x8] sm:$0xff]
  %v804 = vld [vmem:[%s801 + $0x10] sm:$0xff]
  %v805 = vld [vmem:[%s801 + $0x18] sm:$0xff]
  %s806 = scalar_lea.vmem %s3, 16
  %v807 = vld [vmem:[%s806] sm:$0xff]
  %v808 = vperm.slane %v807, 0
  %v810 = vsel %vm40, %v799, 0
  %v813 = vsel %vm40, %v800, 0
  %815 = vmatpush.msra.mxu0 0.0
  %816 = vmatpush.msra.mxu0 0.0
  %817 = vmatpush.msra.mxu0 0.0
  %818 = vmatpush.msra.mxu0 0.0
  %819 = vmatpush.msra.mxu0 0.0
  %820 = vmatpush.msra.mxu0 0.0
  %821 = vmatpush.msra.mxu0 0.0
  %822 = vmatpush.msra.mxu0 0.0
  %823 = vmatpush.msra.mxu0 0.0
  %824 = vmatpush.msra.mxu0 0.0
  %825 = vmatpush.msra.mxu0 0.0
  %826 = vmatpush.msra.mxu0 0.0
  %827 = vmatpush.msra.mxu0 %v805
  %828 = vmatpush.msra.mxu0 %v804
  %829 = vmatpush.msra.mxu0 %v803
  %830 = vmatpush.msra.mxu0 %v802
  %831 = vmatmul.f32.gmra.mxu0 %v810
  %v832 = vpop.f32.mrf.mxu0
  %v833 = vadd.f32 %v808, %v832
  %834 = vmatmul.f32.gmra.mxu0 %v813
  %v835 = vpop.f32.mrf.mxu0
  %v836 = vadd.f32 %v808, %v835
  %837 = vdwg.mxu0
  %v838 = vmul.f32 %v833, %v136
  %v839 = vmul.f32 %v836, %v136
  %v840 = vmul.f32 %v833, %v137
  %v841 = vmul.f32 %v836, %v137
  %v842 = vmul.f32 %v833, %v138
  %v843 = vmul.f32 %v836, %v138
  %v844 = vmul.f32 %v833, %v139
  %v845 = vmul.f32 %v836, %v139
  %v846 = vmul.f32 %v833, %v161
  %v847 = vmul.f32 %v836, %v161
  %v848 = vmul.f32 %v833, %v163
  %v849 = vmul.f32 %v836, %v163
  %v850 = vmul.f32 %v833, %v165
  %v851 = vmul.f32 %v836, %v165
  %v852 = vmul.f32 %v833, %v167
  %v853 = vmul.f32 %v836, %v167
  %856 = vrot.lane.b32.xlu0 %v833, 96
  %v857 = vpop.permute.xlu0 %856
  %858 = vrot.lane.b32.xlu0 %v836, 96
  %v859 = vpop.permute.xlu0 %858
  %v861 = vsel %vm40, %v838, 0
  %v864 = vsel %vm40, %v839, 0
  %v866 = vsel %vm40, %v857, 0
  %v868 = vsel %vm40, %v859, 0
  %870 = vmatpush.xpose.msra.mxu0 0.0
  %871 = vmatpush.xpose.msra.mxu0 0.0
  %872 = vmatpush.xpose.msra.mxu0 0.0
  %873 = vmatpush.xpose.msra.mxu0 0.0
  %874 = vmatpush.xpose.msra.mxu0 0.0
  %875 = vmatpush.xpose.msra.mxu0 0.0
  %876 = vmatpush.xpose.msra.mxu0 0.0
  %877 = vmatpush.xpose.msra.mxu0 0.0
  %878 = vmatpush.xpose.msra.mxu0 0.0
  %879 = vmatpush.xpose.msra.mxu0 0.0
  %880 = vmatpush.xpose.msra.mxu0 0.0
  %881 = vmatpush.xpose.msra.mxu0 0.0
  %882 = vmatpush.xpose.msra.mxu0 0.0
  %883 = vmatpush.xpose.msra.mxu0 0.0
  %884 = vmatpush.xpose.msra.mxu0 %v868
  %885 = vmatpush.xpose.msra.mxu0 %v866
  %886 = vmatmul.f32.gmra.mxu0 %v861
  %v887 = vpop.f32.mrf.mxu0
  %v888 = vadd.f32 %v34, %v887
  %889 = vmatmul.f32.gmra.mxu0 %v864
  %v890 = vpop.f32.mrf.mxu0
  %v891 = vadd.f32 %v35, %v890
  %892 = vdwg.mxu0
  %v894 = vsel %vm40, %v840, 0
  %v897 = vsel %vm40, %v841, 0
  %899 = vmatpush.xpose.msra.mxu0 0.0
  %900 = vmatpush.xpose.msra.mxu0 0.0
  %901 = vmatpush.xpose.msra.mxu0 0.0
  %902 = vmatpush.xpose.msra.mxu0 0.0
  %903 = vmatpush.xpose.msra.mxu0 0.0
  %904 = vmatpush.xpose.msra.mxu0 0.0
  %905 = vmatpush.xpose.msra.mxu0 0.0
  %906 = vmatpush.xpose.msra.mxu0 0.0
  %907 = vmatpush.xpose.msra.mxu0 0.0
  %908 = vmatpush.xpose.msra.mxu0 0.0
  %909 = vmatpush.xpose.msra.mxu0 0.0
  %910 = vmatpush.xpose.msra.mxu0 0.0
  %911 = vmatpush.xpose.msra.mxu0 0.0
  %912 = vmatpush.xpose.msra.mxu0 0.0
  %913 = vmatpush.xpose.msra.mxu0 %v868
  %914 = vmatpush.xpose.msra.mxu0 %v866
  %915 = vmatmul.f32.gmra.mxu0 %v894
  %v916 = vpop.f32.mrf.mxu0
  %v917 = vadd.f32 %v34, %v916
  %918 = vmatmul.f32.gmra.mxu0 %v897
  %v919 = vpop.f32.mrf.mxu0
  %v920 = vadd.f32 %v35, %v919
  %921 = vdwg.mxu0
  %v923 = vsel %vm40, %v842, 0
  %v926 = vsel %vm40, %v843, 0
  %928 = vmatpush.xpose.msra.mxu0 0.0
  %929 = vmatpush.xpose.msra.mxu0 0.0
  %930 = vmatpush.xpose.msra.mxu0 0.0
  %931 = vmatpush.xpose.msra.mxu0 0.0
  %932 = vmatpush.xpose.msra.mxu0 0.0
  %933 = vmatpush.xpose.msra.mxu0 0.0
  %934 = vmatpush.xpose.msra.mxu0 0.0
  %935 = vmatpush.xpose.msra.mxu0 0.0
  %936 = vmatpush.xpose.msra.mxu0 0.0
  %937 = vmatpush.xpose.msra.mxu0 0.0
  %938 = vmatpush.xpose.msra.mxu0 0.0
  %939 = vmatpush.xpose.msra.mxu0 0.0
  %940 = vmatpush.xpose.msra.mxu0 0.0
  %941 = vmatpush.xpose.msra.mxu0 0.0
  %942 = vmatpush.xpose.msra.mxu0 %v868
  %943 = vmatpush.xpose.msra.mxu0 %v866
  %944 = vmatmul.f32.gmra.mxu0 %v923
  %v945 = vpop.f32.mrf.mxu0
  %v946 = vadd.f32 %v34, %v945
  %947 = vmatmul.f32.gmra.mxu0 %v926
  %v948 = vpop.f32.mrf.mxu0
  %v949 = vadd.f32 %v35, %v948
  %950 = vdwg.mxu0
  %v952 = vsel %vm40, %v844, 0
  %v955 = vsel %vm40, %v845, 0
  %957 = vmatpush.xpose.msra.mxu0 0.0
  %958 = vmatpush.xpose.msra.mxu0 0.0
  %959 = vmatpush.xpose.msra.mxu0 0.0
  %960 = vmatpush.xpose.msra.mxu0 0.0
  %961 = vmatpush.xpose.msra.mxu0 0.0
  %962 = vmatpush.xpose.msra.mxu0 0.0
  %963 = vmatpush.xpose.msra.mxu0 0.0
  %964 = vmatpush.xpose.msra.mxu0 0.0
  %965 = vmatpush.xpose.msra.mxu0 0.0
  %966 = vmatpush.xpose.msra.mxu0 0.0
  %967 = vmatpush.xpose.msra.mxu0 0.0
  %968 = vmatpush.xpose.msra.mxu0 0.0
  %969 = vmatpush.xpose.msra.mxu0 0.0
  %970 = vmatpush.xpose.msra.mxu0 0.0
  %971 = vmatpush.xpose.msra.mxu0 %v868
  %972 = vmatpush.xpose.msra.mxu0 %v866
  %973 = vmatmul.f32.gmra.mxu0 %v952
  %v974 = vpop.f32.mrf.mxu0
  %v975 = vadd.f32 %v34, %v974
  %976 = vmatmul.f32.gmra.mxu0 %v955
  %v977 = vpop.f32.mrf.mxu0
  %v978 = vadd.f32 %v35, %v977
  %979 = vdwg.mxu0
  %v980 = vsel %vm306, %v888, -inf
  %981 = vmax.xlane.f32.xlu0 %v980
  %v982 = vpop.xlane.xlu0 %981
  %v983 = vsel %vm306, %v891, -inf
  %984 = vmax.xlane.f32.xlu0 %v983
  %v985 = vpop.xlane.xlu0 %984
  %v986 = vsel %vm306, %v917, -inf
  %987 = vmax.xlane.f32.xlu0 %v986
  %v988 = vpop.xlane.xlu0 %987
  %v989 = vsel %vm306, %v920, -inf
  %990 = vmax.xlane.f32.xlu0 %v989
  %v991 = vpop.xlane.xlu0 %990
  %v992 = vsel %vm306, %v946, -inf
  %993 = vmax.xlane.f32.xlu0 %v992
  %v994 = vpop.xlane.xlu0 %993
  %v995 = vsel %vm306, %v949, -inf
  %996 = vmax.xlane.f32.xlu0 %v995
  %v997 = vpop.xlane.xlu0 %996
  %v998 = vsel %vm306, %v975, -inf
  %999 = vmax.xlane.f32.xlu0 %v998
  %v1000 = vpop.xlane.xlu0 %999
  %v1001 = vsel %vm306, %v978, -inf
  %1002 = vmax.xlane.f32.xlu0 %v1001
  %v1003 = vpop.xlane.xlu0 %1002
  %v1004 = vsub.f32 %v888, %v982
  %v1005 = vsub.f32 %v891, %v985
  %v1006 = vsub.f32 %v917, %v988
  %v1007 = vsub.f32 %v920, %v991
  %v1008 = vsub.f32 %v946, %v994
  %v1009 = vsub.f32 %v949, %v997
  %v1010 = vsub.f32 %v975, %v1000
  %v1011 = vsub.f32 %v978, %v1003
  %v1012 = vmul.f32 %v1004, 1.442695
  %v1013 = vpow.pop %v1012
  %v1014 = vmul.f32 %v1005, 1.442695
  %v1015 = vpow.pop %v1014
  %v1016 = vmul.f32 %v1006, 1.442695
  %v1017 = vpow.pop %v1016
  %v1018 = vmul.f32 %v1007, 1.442695
  %v1019 = vpow.pop %v1018
  %v1020 = vmul.f32 %v1008, 1.442695
  %v1021 = vpow.pop %v1020
  %v1022 = vmul.f32 %v1009, 1.442695
  %v1023 = vpow.pop %v1022
  %v1024 = vmul.f32 %v1010, 1.442695
  %v1025 = vpow.pop %v1024
  %v1026 = vmul.f32 %v1011, 1.442695
  %v1027 = vpow.pop %v1026
  %v1028 = vsel %vm306, %v1013, 0.0
  %1029 = vadd.xlane.f32.xlu0 %v1028
  %v1030 = vpop.xlane.xlu0 %1029
  %v1031 = vsel %vm306, %v1015, 0.0
  %1032 = vadd.xlane.f32.xlu0 %v1031
  %v1033 = vpop.xlane.xlu0 %1032
  %v1034 = vsel %vm306, %v1017, 0.0
  %1035 = vadd.xlane.f32.xlu0 %v1034
  %v1036 = vpop.xlane.xlu0 %1035
  %v1037 = vsel %vm306, %v1019, 0.0
  %1038 = vadd.xlane.f32.xlu0 %v1037
  %v1039 = vpop.xlane.xlu0 %1038
  %v1040 = vsel %vm306, %v1021, 0.0
  %1041 = vadd.xlane.f32.xlu0 %v1040
  %v1042 = vpop.xlane.xlu0 %1041
  %v1043 = vsel %vm306, %v1023, 0.0
  %1044 = vadd.xlane.f32.xlu0 %v1043
  %v1045 = vpop.xlane.xlu0 %1044
  %v1046 = vsel %vm306, %v1025, 0.0
  %1047 = vadd.xlane.f32.xlu0 %v1046
  %v1048 = vpop.xlane.xlu0 %1047
  %v1049 = vsel %vm306, %v1027, 0.0
  %1050 = vadd.xlane.f32.xlu0 %v1049
  %v1051 = vpop.xlane.xlu0 %1050
  %v1052 = vrcp.pop %v1030
  %v1053 = vrcp.pop %v1033
  %v1054 = vrcp.pop %v1036
  %v1055 = vrcp.pop %v1039
  %v1056 = vrcp.pop %v1042
  %v1057 = vrcp.pop %v1045
  %v1058 = vrcp.pop %v1048
  %v1059 = vrcp.pop %v1051
  %v1060 = vmul.f32 %v1013, %v1052
  %v1061 = vmul.f32 %v1015, %v1053
  %v1062 = vmul.f32 %v1017, %v1054
  %v1063 = vmul.f32 %v1019, %v1055
  %v1064 = vmul.f32 %v1021, %v1056
  %v1065 = vmul.f32 %v1023, %v1057
  %v1066 = vmul.f32 %v1025, %v1058
  %v1067 = vmul.f32 %v1027, %v1059
  %1070 = vrot.lane.b32.xlu0 %v846, 64
  %v1071 = vpop.permute.xlu0 %1070
  %1072 = vrot.lane.b32.xlu0 %v847, 64
  %v1073 = vpop.permute.xlu0 %1072
  %v1077 = vsel %vm306, %v1060, 0
  %v1080 = vsel %vm306, %v1061, 0
  %1082 = vmatpush.msra.mxu0 0.0
  %1083 = vmatpush.msra.mxu0 0.0
  %1084 = vmatpush.msra.mxu0 0.0
  %1085 = vmatpush.msra.mxu0 0.0
  %1086 = vmatpush.msra.mxu0 0.0
  %1087 = vmatpush.msra.mxu0 0.0
  %1088 = vmatpush.msra.mxu0 0.0
  %1089 = vmatpush.msra.mxu0 0.0
  %1090 = vmatpush.msra.mxu0 0.0
  %1091 = vmatpush.msra.mxu0 0.0
  %1092 = vmatpush.msra.mxu0 0.0
  %1093 = vmatpush.msra.mxu0 0.0
  %1094 = vmatpush.msra.mxu0 0.0
  %1095 = vmatpush.msra.mxu0 0.0
  %1096 = vmatpush.msra.mxu0 %v1073
  %1097 = vmatpush.msra.mxu0 %v1071
  %1098 = vmatmul.f32.gmra.mxu0 %v1077
  %v1099 = vpop.f32.mrf.mxu0
  %v1100 = vadd.f32 0.0, %v1099
  %1101 = vmatmul.f32.gmra.mxu0 %v1080
  %v1102 = vpop.f32.mrf.mxu0
  %v1103 = vadd.f32 0.0, %v1102
  %1104 = vdwg.mxu0
  %1107 = vrot.lane.b32.xlu0 %v848, 64
  %v1108 = vpop.permute.xlu0 %1107
  %1109 = vrot.lane.b32.xlu0 %v849, 64
  %v1110 = vpop.permute.xlu0 %1109
  %v1114 = vsel %vm306, %v1062, 0
  %v1117 = vsel %vm306, %v1063, 0
  %1119 = vmatpush.msra.mxu0 0.0
  %1120 = vmatpush.msra.mxu0 0.0
  %1121 = vmatpush.msra.mxu0 0.0
  %1122 = vmatpush.msra.mxu0 0.0
  %1123 = vmatpush.msra.mxu0 0.0
  %1124 = vmatpush.msra.mxu0 0.0
  %1125 = vmatpush.msra.mxu0 0.0
  %1126 = vmatpush.msra.mxu0 0.0
  %1127 = vmatpush.msra.mxu0 0.0
  %1128 = vmatpush.msra.mxu0 0.0
  %1129 = vmatpush.msra.mxu0 0.0
  %1130 = vmatpush.msra.mxu0 0.0
  %1131 = vmatpush.msra.mxu0 0.0
  %1132 = vmatpush.msra.mxu0 0.0
  %1133 = vmatpush.msra.mxu0 %v1110
  %1134 = vmatpush.msra.mxu0 %v1108
  %1135 = vmatmul.f32.gmra.mxu0 %v1114
  %v1136 = vpop.f32.mrf.mxu0
  %v1137 = vadd.f32 0.0, %v1136
  %1138 = vmatmul.f32.gmra.mxu0 %v1117
  %v1139 = vpop.f32.mrf.mxu0
  %v1140 = vadd.f32 0.0, %v1139
  %1141 = vdwg.mxu0
  %1144 = vrot.lane.b32.xlu0 %v850, 64
  %v1145 = vpop.permute.xlu0 %1144
  %1146 = vrot.lane.b32.xlu0 %v851, 64
  %v1147 = vpop.permute.xlu0 %1146
  %v1151 = vsel %vm306, %v1064, 0
  %v1154 = vsel %vm306, %v1065, 0
  %1156 = vmatpush.msra.mxu0 0.0
  %1157 = vmatpush.msra.mxu0 0.0
  %1158 = vmatpush.msra.mxu0 0.0
  %1159 = vmatpush.msra.mxu0 0.0
  %1160 = vmatpush.msra.mxu0 0.0
  %1161 = vmatpush.msra.mxu0 0.0
  %1162 = vmatpush.msra.mxu0 0.0
  %1163 = vmatpush.msra.mxu0 0.0
  %1164 = vmatpush.msra.mxu0 0.0
  %1165 = vmatpush.msra.mxu0 0.0
  %1166 = vmatpush.msra.mxu0 0.0
  %1167 = vmatpush.msra.mxu0 0.0
  %1168 = vmatpush.msra.mxu0 0.0
  %1169 = vmatpush.msra.mxu0 0.0
  %1170 = vmatpush.msra.mxu0 %v1147
  %1171 = vmatpush.msra.mxu0 %v1145
  %1172 = vmatmul.f32.gmra.mxu0 %v1151
  %v1173 = vpop.f32.mrf.mxu0
  %v1174 = vadd.f32 0.0, %v1173
  %1175 = vmatmul.f32.gmra.mxu0 %v1154
  %v1176 = vpop.f32.mrf.mxu0
  %v1177 = vadd.f32 0.0, %v1176
  %1178 = vdwg.mxu0
  %1181 = vrot.lane.b32.xlu0 %v852, 64
  %v1182 = vpop.permute.xlu0 %1181
  %1183 = vrot.lane.b32.xlu0 %v853, 64
  %v1184 = vpop.permute.xlu0 %1183
  %v1188 = vsel %vm306, %v1066, 0
  %v1191 = vsel %vm306, %v1067, 0
  %1193 = vmatpush.msra.mxu0 0.0
  %1194 = vmatpush.msra.mxu0 0.0
  %1195 = vmatpush.msra.mxu0 0.0
  %1196 = vmatpush.msra.mxu0 0.0
  %1197 = vmatpush.msra.mxu0 0.0
  %1198 = vmatpush.msra.mxu0 0.0
  %1199 = vmatpush.msra.mxu0 0.0
  %1200 = vmatpush.msra.mxu0 0.0
  %1201 = vmatpush.msra.mxu0 0.0
  %1202 = vmatpush.msra.mxu0 0.0
  %1203 = vmatpush.msra.mxu0 0.0
  %1204 = vmatpush.msra.mxu0 0.0
  %1205 = vmatpush.msra.mxu0 0.0
  %1206 = vmatpush.msra.mxu0 0.0
  %1207 = vmatpush.msra.mxu0 %v1184
  %1208 = vmatpush.msra.mxu0 %v1182
  %1209 = vmatmul.f32.gmra.mxu0 %v1188
  %v1210 = vpop.f32.mrf.mxu0
  %v1211 = vadd.f32 0.0, %v1210
  %1212 = vmatmul.f32.gmra.mxu0 %v1191
  %v1213 = vpop.f32.mrf.mxu0
  %v1214 = vadd.f32 0.0, %v1213
  %1215 = vdwg.mxu0
  %v1216 = vsel %vm40, %v1100, 0.0
  %v1217 = vsel %vm40, %v1137, 0.0
  %v1218 = vadd.f32 %v1216, %v1217
  %v1219 = vsel %vm40, %v1174, 0.0
  %v1220 = vadd.f32 %v1218, %v1219
  %v1221 = vsel %vm40, %v1211, 0.0
  %v1222 = vadd.f32 %v1220, %v1221
  %v1223 = vsel %vm40, %v1103, 0.0
  %v1224 = vsel %vm40, %v1140, 0.0
  %v1225 = vadd.f32 %v1223, %v1224
  %v1226 = vsel %vm40, %v1177, 0.0
  %v1227 = vadd.f32 %v1225, %v1226
  %v1228 = vsel %vm40, %v1214, 0.0
  %v1229 = vadd.f32 %v1227, %v1228
  %1234 = vrot.lane.b32.xlu0 %v802, 32
  %v1235 = vpop.permute.xlu0 %1234
  %1236 = vrot.lane.b32.xlu0 %v803, 32
  %v1237 = vpop.permute.xlu0 %1236
  %1238 = vrot.lane.b32.xlu0 %v804, 32
  %v1239 = vpop.permute.xlu0 %1238
  %1240 = vrot.lane.b32.xlu0 %v805, 32
  %v1241 = vpop.permute.xlu0 %1240
  %1247 = vrot.lane.b32.xlu0 %v808, 32
  %v1248 = vpop.permute.xlu0 %1247
  %v1251 = vsel %vm40, %v1222, 0
  %v1254 = vsel %vm40, %v1229, 0
  %1256 = vmatpush.msra.mxu0 0.0
  %1257 = vmatpush.msra.mxu0 0.0
  %1258 = vmatpush.msra.mxu0 0.0
  %1259 = vmatpush.msra.mxu0 0.0
  %1260 = vmatpush.msra.mxu0 0.0
  %1261 = vmatpush.msra.mxu0 0.0
  %1262 = vmatpush.msra.mxu0 0.0
  %1263 = vmatpush.msra.mxu0 0.0
  %1264 = vmatpush.msra.mxu0 0.0
  %1265 = vmatpush.msra.mxu0 0.0
  %1266 = vmatpush.msra.mxu0 0.0
  %1267 = vmatpush.msra.mxu0 0.0
  %1268 = vmatpush.msra.mxu0 %v1241
  %1269 = vmatpush.msra.mxu0 %v1239
  %1270 = vmatpush.msra.mxu0 %v1237
  %1271 = vmatpush.msra.mxu0 %v1235
  %1272 = vmatmul.f32.gmra.mxu0 %v1251
  %v1273 = vpop.f32.mrf.mxu0
  %v1274 = vadd.f32 %v1248, %v1273
  %1275 = vmatmul.f32.gmra.mxu0 %v1254
  %v1276 = vpop.f32.mrf.mxu0
  %v1277 = vadd.f32 %v1248, %v1276
  %1278 = vdwg.mxu0
  %v1279 = vadd.f32 %v1274, %v799
  %v1280 = vadd.f32 %v1277, %v800
  %v1281 = vsel %vm40, %v1279, 0.0
  %1282 = vadd.xlane.f32.xlu0 %v1281
  %v1283 = vpop.xlane.xlu0 %1282
  %v1284 = vsel %vm40, %v1280, 0.0
  %1285 = vadd.xlane.f32.xlu0 %v1284
  %v1286 = vpop.xlane.xlu0 %1285
  %v1287 = vmul.f32 %v1283, %v53
  %v1288 = vmul.f32 %v1286, %v53
  %v1289 = vsub.f32 %v1279, %v1287
  %v1290 = vsub.f32 %v1280, %v1288
  %v1291 = vmul.f32 %v1289, %v1289
  %v1292 = vmul.f32 %v1290, %v1290
  %v1293 = vsel %vm40, %v1291, 0.0
  %1294 = vadd.xlane.f32.xlu0 %v1293
  %v1295 = vpop.xlane.xlu0 %1294
  %v1296 = vsel %vm40, %v1292, 0.0
  %1297 = vadd.xlane.f32.xlu0 %v1296
  %v1298 = vpop.xlane.xlu0 %1297
  %v1299 = vmul.f32 %v1295, %v53
  %v1300 = vmul.f32 %v1298, %v53
  %v1301 = vadd.f32 %v1299, 1e-12
  %v1302 = vadd.f32 %v1300, 1e-12
  %v1303 = vrsqrt.pop %v1301
  %v1304 = vmul.f32 %v1303, %v1301
  %v1305 = vmul.f32 %v1304, %v1303
  %v1306 = vmul.f32 0.5, %v1305
  %v1307 = vsub.f32 1.5, %v1306
  %v1308 = vmul.f32 %v1303, %v1307
  %vm1309 = vweird.f32 %v1301
  %vm1310 = vweird.f32 %v1303
  %vm1311 = vmor %vm1309, %vm1310
  %v1312 = vsel %vm1311, %v1303, %v1308
  %v1313 = vrsqrt.pop %v1302
  %v1314 = vmul.f32 %v1313, %v1302
  %v1315 = vmul.f32 %v1314, %v1313
  %v1316 = vmul.f32 0.5, %v1315
  %v1317 = vsub.f32 1.5, %v1316
  %v1318 = vmul.f32 %v1313, %v1317
  %vm1319 = vweird.f32 %v1302
  %vm1320 = vweird.f32 %v1313
  %vm1321 = vmor %vm1319, %vm1320
  %v1322 = vsel %vm1321, %v1313, %v1318
  %v1323 = vmul.f32 %v1289, %v1312
  %v1324 = vmul.f32 %v1290, %v1322
  %v1325 = vperm.slane %v807, 1
  %v1326 = vmul.f32 %v1323, %v1325
  %v1327 = vmul.f32 %v1324, %v1325
  %v1328 = vperm.slane %v807, 2
  %v1329 = vadd.f32 %v1326, %v1328
  %v1330 = vadd.f32 %v1327, %v1328
  %s1331 = scalar_lea.vmem %s5, 32
  %v1332 = vld [vmem:[%s1331] sm:$0xff]
  %v1333 = vld [vmem:[%s1331 + $0x8] sm:$0xff]
  %v1334 = vld [vmem:[%s1331 + $0x10] sm:$0xff]
  %v1335 = vld [vmem:[%s1331 + $0x18] sm:$0xff]
  %v1336 = vperm.slane %v807, 6
  %v1338 = vsel %vm40, %v1329, 0
  %v1341 = vsel %vm40, %v1330, 0
  %1343 = vmatpush.msra.mxu0 0.0
  %1344 = vmatpush.msra.mxu0 0.0
  %1345 = vmatpush.msra.mxu0 0.0
  %1346 = vmatpush.msra.mxu0 0.0
  %1347 = vmatpush.msra.mxu0 0.0
  %1348 = vmatpush.msra.mxu0 0.0
  %1349 = vmatpush.msra.mxu0 0.0
  %1350 = vmatpush.msra.mxu0 0.0
  %1351 = vmatpush.msra.mxu0 0.0
  %1352 = vmatpush.msra.mxu0 0.0
  %1353 = vmatpush.msra.mxu0 0.0
  %1354 = vmatpush.msra.mxu0 0.0
  %1355 = vmatpush.msra.mxu0 %v1335
  %1356 = vmatpush.msra.mxu0 %v1334
  %1357 = vmatpush.msra.mxu0 %v1333
  %1358 = vmatpush.msra.mxu0 %v1332
  %1359 = vmatmul.f32.gmra.mxu0 %v1338
  %v1360 = vpop.f32.mrf.mxu0
  %v1361 = vadd.f32 %v1336, %v1360
  %1362 = vmatmul.f32.gmra.mxu0 %v1341
  %v1363 = vpop.f32.mrf.mxu0
  %v1364 = vadd.f32 %v1336, %v1363
  %1365 = vdwg.mxu0
  %v1366 = vmul.f32 %v1361, 0.5
  %v1367 = vmul.f32 %v1364, 0.5
  %v1368 = vmul.f32 %v1361, 0.044715
  %v1369 = vmul.f32 %v1364, 0.044715
  %v1370 = vmul.f32 %v1368, %v1361
  %v1371 = vmul.f32 %v1369, %v1364
  %v1372 = vmul.f32 %v1370, %v1361
  %v1373 = vmul.f32 %v1371, %v1364
  %v1374 = vadd.f32 %v1361, %v1372
  %v1375 = vadd.f32 %v1364, %v1373
  %v1376 = vmul.f32 %v1374, 0.7978846
  %v1377 = vmul.f32 %v1375, 0.7978846
  %v1378 = vtanh.pop %v1376
  %v1379 = vtanh.pop %v1377
  %v1380 = vadd.f32 %v1378, 1.0
  %v1381 = vadd.f32 %v1379, 1.0
  %v1382 = vmul.f32 %v1366, %v1380
  %v1383 = vmul.f32 %v1367, %v1381
  %s1384 = scalar_lea.vmem %s6, 64
  %v1385 = vld [vmem:[%s1384] sm:$0xff]
  %v1386 = vld [vmem:[%s1384 + $0x8] sm:$0xff]
  %v1387 = vld [vmem:[%s1384 + $0x10] sm:$0xff]
  %v1388 = vld [vmem:[%s1384 + $0x18] sm:$0xff]
  %v1389 = vld [vmem:[%s1384 + $0x20] sm:$0xff]
  %v1390 = vld [vmem:[%s1384 + $0x28] sm:$0xff]
  %v1391 = vld [vmem:[%s1384 + $0x30] sm:$0xff]
  %v1392 = vld [vmem:[%s1384 + $0x38] sm:$0xff]
  %v1393 = vperm.slane %v807, 5
  %v1395 = vsel %vm719, %v1382, 0
  %v1398 = vsel %vm719, %v1383, 0
  %1400 = vmatpush.msra.mxu0 0.0
  %1401 = vmatpush.msra.mxu0 0.0
  %1402 = vmatpush.msra.mxu0 0.0
  %1403 = vmatpush.msra.mxu0 0.0
  %1404 = vmatpush.msra.mxu0 0.0
  %1405 = vmatpush.msra.mxu0 0.0
  %1406 = vmatpush.msra.mxu0 0.0
  %1407 = vmatpush.msra.mxu0 0.0
  %1408 = vmatpush.msra.mxu0 %v1392
  %1409 = vmatpush.msra.mxu0 %v1391
  %1410 = vmatpush.msra.mxu0 %v1390
  %1411 = vmatpush.msra.mxu0 %v1389
  %1412 = vmatpush.msra.mxu0 %v1388
  %1413 = vmatpush.msra.mxu0 %v1387
  %1414 = vmatpush.msra.mxu0 %v1386
  %1415 = vmatpush.msra.mxu0 %v1385
  %1416 = vmatmul.f32.gmra.mxu0 %v1395
  %v1417 = vpop.f32.mrf.mxu0
  %v1418 = vadd.f32 %v1393, %v1417
  %1419 = vmatmul.f32.gmra.mxu0 %v1398
  %v1420 = vpop.f32.mrf.mxu0
  %1421 = vdwg.mxu0
  %v1422 = vadd.f32 %v1418, %v1329
  %v1423 = vsel %vm40, %v1422, 0.0
  %1424 = vadd.xlane.f32.xlu0 %v1423
  %v1425 = vpop.xlane.xlu0 %1424
  %v1426 = vmul.f32 %v1425, %v53
  %v1427 = vsub.f32 %v1422, %v1426
  %v1428 = vmul.f32 %v1427, %v1427
  %v1429 = vsel %vm40, %v1428, 0.0
  %1430 = vadd.xlane.f32.xlu0 %v1429
  %v1431 = vpop.xlane.xlu0 %1430
  %v1432 = vmul.f32 %v1431, %v53
  %v1433 = vadd.f32 %v1432, 1e-12
  %v1434 = vrsqrt.pop %v1433
  %v1435 = vmul.f32 %v1434, %v1433
  %v1436 = vmul.f32 %v1435, %v1434
  %v1437 = vmul.f32 0.5, %v1436
  %v1438 = vsub.f32 1.5, %v1437
  %v1439 = vmul.f32 %v1434, %v1438
  %vm1440 = vweird.f32 %v1433
  %vm1441 = vweird.f32 %v1434
  %vm1442 = vmor %vm1440, %vm1441
  %v1443 = vsel %vm1442, %v1434, %v1439
  %v1444 = vmul.f32 %v1427, %v1443
  %v1445 = vperm.slane %v807, 3
  %v1446 = vmul.f32 %v1444, %v1445
  %v1447 = vperm.slane %v807, 4
  %v1448 = vadd.f32 %v1446, %v1447
  %v1449 = vperm.slane %v37, 2
  %v1450 = vmul.f32 %v1448, %v1449
  %vm1451 = vcmask 254976
  %v1452 = vsel %vm1451, %v1450, 0.0
  %1453 = vadd.xlane.f32.xlu0 %v1452
  %v1454 = vpop.xlane.xlu0 %1453
  %v1455 = vperm.slane %v37, 3
  %v1456 = vadd.f32 %v1454, %v1455
  %v1457 = vld [vmem:[%s1 + $0x10] sm:$0x3]
  %v1458 = vmax.f32 %v1456, 0.0
  %v1459 = vmul.f32 %v1456, %v1457
  %v1460 = vsub.f32 %v1458, %v1459
  %v1461 = vand.u32 2147483647, %v1456
  %v1462 = vsub.f32 0.0, %v1461
  %v1463 = vmul.f32 %v1462, 1.442695
  %v1464 = vpow.pop %v1463
  %v1465 = vadd.f32 %v1464, 1.0
  %v1466 = vlog2.pop %v1465
  %v1467 = vmul.f32 %v1466, 0.6931472
  %v1468 = vadd.f32 %v1460, %v1467
  %vm1469 = vcmask 1024
  %v1470 = vsel %vm1469, %v1468, 0.0
  %v1471 = vrot.slane %v1470, 4
  %v1472 = vadd.f32 %v1470, %v1471
  %v1473 = vrot.slane %v1472, 2
  %v1474 = vadd.f32 %v1472, %v1473
  %v1475 = vrot.slane %v1474, 1
  %v1476 = vadd.f32 %v1474, %v1475
  %v1477 = vrcp.pop 2.0
  %v1478 = vmul.f32 2.0, %v1477
  %v1479 = vsub.f32 1.0, %v1478
  %v1480 = vmul.f32 %v1477, %v1479
  %v1481 = vadd.f32 %v1477, %v1480
  %vm1482 = vweird.f32 %v1477
  %v1483 = vsel %vm1482, %v1477, %v1481
  %v1484 = vmul.f32 %v1476, %v1483
  %1485 = vst [vmem:[%s7] sm:$0xff] 0.0
  %1487 = vset.pattern.permute.xlu0 0
  %1488 = vperm.xlu0 %1487, %v1456
  %v1489 = vpop.permute.xlu0 %1488
  %1491 = vst [vmem:[%s7] sm:$0x3] %v1489
  %1493 = vset.pattern.permute.xlu0 0
  %1494 = vperm.xlu0 %1493, %v1484
  %v1495 = vpop.permute.xlu0 %1494
  %1497 = vst [vmem:[%s7 + $0x2] sm:$0x1] %v1495
  // Predicated region
  $region30: #{biobert_ner_forward.1} parent=0 // pred_check
    _
  $region31: #{biobert_ner_forward.1} parent=0 // pred_check_branch
    %1499 = sbr.rel (0) target = $region33
  $region32: #{biobert_ner_forward.1} parent=0 // pred_region
    _
  $region33: #{biobert_ner_forward.1} parent=0 // pred_fallthru
    _
  // Predicated region
  $region34: #{biobert_ner_forward.1} parent=0 // pred_check
    _
  $region35: #{biobert_ner_forward.1} parent=0 // pred_check_branch
    %1501 = sbr.rel (0) target = $region37
  $region36: #{biobert_ner_forward.1} parent=0 // pred_region
    _
  $region37: #{biobert_ner_forward.1} parent=0 // pred_fallthru
    _

</llo_original>
